<compile_context>
chip_gen: v7x
topology: tpu7x:2x2x1
jax: 0.10.0
libtpu: 0.0.40
codegen_flags: <defaults>
</compile_context>

<pallas_src>
import functools
import math

import jax
import jax.numpy as jnp
from jax import lax
from jax.experimental import pallas as pl
from jax.experimental.pallas import tpu as pltpu

TEMPERATURE = 0.07
BASE_TEMPERATURE = 0.07


def _round_up(x, m):
    return ((x + m - 1) // m) * m


def _supcon_kernel(q_ref, k_ref, lrow_ref, lcol_ref, out_ref,
                   m_ref, l_ref, pos_ref, sml_ref, *,
                   n_valid, n_total, temperature, base_temperature):
    """One (row-tile i, column-tile j) grid step.

    q_ref   : [tm, Dp] bf16   anchor features   (pre-scaled by 1/sqrt(T))
    k_ref   : [tn, Dp] bf16   contrast features (same array, column tile)
    lrow_ref: [tm, 1 ] int32  anchor labels
    lcol_ref: [1 , tn] int32  contrast labels
    out_ref : [tm, 1 ] f32    per-anchor loss (written on the last column tile)
    scratch : m (running max), l (running exp-sum), pos (positive count),
              sml (sum of mask*logits), each [tm, 1] f32.
    """
    i = pl.program_id(0)
    j = pl.program_id(1)
    tm = q_ref.shape[0]
    tn = k_ref.shape[0]

    @pl.when(j == 0)
    def _():
        m_ref[...] = jnp.full(m_ref.shape, -jnp.inf, jnp.float32)
        l_ref[...] = jnp.zeros(l_ref.shape, jnp.float32)
        pos_ref[...] = jnp.zeros(pos_ref.shape, jnp.float32)
        sml_ref[...] = jnp.zeros(sml_ref.shape, jnp.float32)

    # Logits tile on the MXU: bf16 x bf16 -> f32 accumulation, contracting the
    # last dims of both operands (no in-kernel transpose of the contrast tile).
    # 1/temperature is already folded into the operands.
    logits = lax.dot_general(
        q_ref[...], k_ref[...],
        dimension_numbers=(((1,), (1,)), ((), ())),
        preferred_element_type=jnp.float32)                       # [tm, tn]

    # Online max.  Same stabilizing shift as the torch reference: raw row max,
    # diagonal included — it cancels exactly in log_prob, only stability matters.
    m_prev = m_ref[...]
    m_new = jnp.maximum(m_prev, jnp.max(logits, axis=1, keepdims=True))
    alpha = jnp.exp(m_prev - m_new)                               # [tm, 1]

    # "keep" = not the self-pair (and, if N was padded, a real contrast column).
    # One broadcast compare of a [tm,1] and a [1,tn] offset-iota — no N x N iota.
    grow = lax.broadcasted_iota(jnp.int32, (tm, 1), 0) + i * tm
    gcol = lax.broadcasted_iota(jnp.int32, (1, tn), 1) + j * tn
    keep = grow != gcol
    if n_valid < n_total:            # static: only emitted when padding exists
        keep = keep & (gcol < n_valid)

    p = jnp.where(keep, jnp.exp(logits - m_new), 0.0)             # [tm, tn]
    match = (lrow_ref[...] == lcol_ref[...]) & keep               # [tm, tn] bool

    l_ref[...] = alpha * l_ref[...] + jnp.sum(p, axis=1, keepdims=True)
    pos_ref[...] += jnp.sum(jnp.where(match, 1.0, 0.0), axis=1, keepdims=True)
    sml_ref[...] += jnp.sum(jnp.where(match, logits, 0.0), axis=1, keepdims=True)
    m_ref[...] = m_new

    @pl.when(j == pl.num_programs(1) - 1)
    def _():
        pos = pos_ref[...]
        pos_safe = jnp.where(pos < 1e-6, 1.0, pos)                # torch.where(...<1e-6, 1, ...)
        log_denom = m_ref[...] + jnp.log(l_ref[...])              # logsumexp over kept cols
        # sum(mask*log_prob) = sum(mask*logits) - pos * logsumexp
        mean_log_prob_pos = (sml_ref[...] - pos * log_denom) * pl.reciprocal(
            pos_safe, approx=True)
        out_ref[...] = -(temperature / base_temperature) * mean_log_prob_pos


def supcon_loss(features, labels, temperature=TEMPERATURE,
                base_temperature=BASE_TEMPERATURE, block=256):
    """features: [bsz, n_views, ...] (trailing dims flattened); labels: [bsz] int.

    Returns the scalar SupCon loss ('all' contrast mode).
    `block` = square tile size; multiples of 128 (256/512 suit v6e/v7x).
    """
    if features.ndim < 3:
        raise ValueError("`features` needs to be [bsz, n_views, ...], "
                         "at least 3 dimensions are required")
    if features.ndim > 3:
        features = features.reshape(features.shape[0], features.shape[1], -1)

    b, v, d = features.shape
    n = b * v

    # contrast_feature = cat(unbind(features, dim=1), dim=0) -> view-major [V*B, D]
    cf = jnp.reshape(jnp.transpose(features, (1, 0, 2)), (n, d)).astype(jnp.float32)
    # Fold 1/temperature into the single shared operand: (x/sqrt(T))·(y/sqrt(T)) = x·y/T.
    cf = cf * jnp.float32(1.0 / math.sqrt(float(temperature)))

    # Lane-dense tiles: zero-pad D to a multiple of 128 (zero columns don't change
    # any dot product).  Pad N to a multiple of the tile; padded columns are
    # excluded in-kernel, padded rows are dropped before the final mean.
    d_pad = _round_up(max(d, 1), 128)
    tile = max(128, (min(int(block), _round_up(n, 128)) // 128) * 128)
    n_pad = _round_up(n, tile)

    feat = jnp.zeros((n_pad, d_pad), jnp.float32).at[:n, :d].set(cf)
    feat = feat.astype(jnp.bfloat16)      # bf16 MXU operands, f32 accumulation

    labels_rep = jnp.tile(jnp.asarray(labels).reshape(-1), v).astype(jnp.int32)
    lab = jnp.full((n_pad,), -1, jnp.int32).at[:n].set(labels_rep)
    lbl_row = lab.reshape(n_pad, 1)
    lbl_col = lab.reshape(1, n_pad)

    grid = (n_pad // tile, n_pad // tile)

    kernel = functools.partial(
        _supcon_kernel,
        n_valid=n, n_total=n_pad,
        temperature=float(temperature),
        base_temperature=float(base_temperature))

    per_anchor = pl.pallas_call(
        kernel,
        out_shape=jax.ShapeDtypeStruct((n_pad, 1), jnp.float32),
        grid_spec=pltpu.PrefetchScalarGridSpec(
            num_scalar_prefetch=0,
            grid=grid,
            in_specs=[
                pl.BlockSpec((tile, d_pad), lambda i, j: (i, 0)),   # anchor rows
                pl.BlockSpec((tile, d_pad), lambda i, j: (j, 0)),   # contrast cols
                pl.BlockSpec((tile, 1), lambda i, j: (i, 0)),       # row labels
                pl.BlockSpec((1, tile), lambda i, j: (0, j)),       # col labels
            ],
            out_specs=pl.BlockSpec((tile, 1), lambda i, j: (i, 0)),
            scratch_shapes=[pltpu.VMEM((tile, 1), jnp.float32) for _ in range(4)],
        ),
        compiler_params=pltpu.CompilerParams(
            dimension_semantics=("parallel", "arbitrary"),
            vmem_limit_bytes=48 * 1024 * 1024,
        ),
    )(feat, feat, lbl_row, lbl_col)

    # loss.view(anchor_count, batch_size).mean() == mean over all N real anchors.
    return jnp.mean(per_anchor[:n, 0])


def supcon_loss_ref(features, labels, temperature=TEMPERATURE,
                    base_temperature=BASE_TEMPERATURE):
    """Pure-JAX f32 reference mirroring the torch forward ('all' mode)."""
    b, v, d = features.shape
    n = b * v
    cf = jnp.reshape(jnp.transpose(features, (1, 0, 2)), (n, d)).astype(jnp.float32)
    lab = jnp.tile(labels.reshape(-1), v)
    logits = (cf @ cf.T) / temperature
    logits = logits - jnp.max(logits, axis=1, keepdims=True)
    logits_mask = 1.0 - jnp.eye(n, dtype=jnp.float32)
    mask = (lab[:, None] == lab[None, :]).astype(jnp.float32) * logits_mask
    exp_logits = jnp.exp(logits) * logits_mask
    log_prob = logits - jnp.log(jnp.sum(exp_logits, axis=1, keepdims=True))
    pos = jnp.sum(mask, axis=1)
    pos = jnp.where(pos < 1e-6, 1.0, pos)
    mean_lp = jnp.sum(mask * log_prob, axis=1) / pos
    loss = -(temperature / base_temperature) * mean_lp
    return loss.mean()


if __name__ == "__main__":
    key = jax.random.PRNGKey(0)
    kf, kl = jax.random.split(key)

    B, V, D = 8, 2, 32                      # bsz, n_views, feature dim
    features = jax.random.normal(kf, (B, V, D), dtype=jnp.float32)
    # L2-normalize per feature vector (typical SupCon usage)
    features = features / jnp.linalg.norm(features, axis=-1, keepdims=True)
    labels = jax.random.randint(kl, (B,), 0, 4, dtype=jnp.int32)

    loss = jax.block_until_ready(supcon_loss(features, labels))
    ref = supcon_loss_ref(features, labels)

    # bf16 MXU operands (f32 accumulation) -> loosened tolerance vs the f32 ref.
    assert jnp.allclose(loss, ref, rtol=5e-2, atol=5e-2), (loss, ref)

    print("KERNEL_OK")
</pallas_src>

<mosaic_0001>
module attributes {stable_mosaic.version = 11 : i64} {
  func.func @_supcon_kernel(%arg0: i32, %arg1: i32, %arg2: memref<128x128xbf16, #tpu.memory_space<vmem>>, %arg3: memref<128x128xbf16, #tpu.memory_space<vmem>>, %arg4: memref<128x1xi32, #tpu.memory_space<vmem>>, %arg5: memref<1x128xi32, #tpu.memory_space<vmem>>, %arg6: memref<128x1xf32, #tpu.memory_space<vmem>>, %arg7: memref<128x1xf32, #tpu.memory_space<vmem>>, %arg8: memref<128x1xf32, #tpu.memory_space<vmem>>, %arg9: memref<128x1xf32, #tpu.memory_space<vmem>>, %arg10: memref<128x1xf32, #tpu.memory_space<vmem>>) attributes {dimension_semantics = [#tpu.dimension_semantics<parallel>, #tpu.dimension_semantics<arbitrary>], iteration_bounds = array<i64: 1, 1>, scalar_prefetch = 0 : i64, scratch_operands = 4 : i64, tpu.core_type = #tpu.core_type<tc>, window_params = [{transform_indices = @transform_0, window_bounds = array<i64: 128, 128>}, {transform_indices = @transform_1, window_bounds = array<i64: 128, 128>}, {transform_indices = @transform_2, window_bounds = array<i64: 128, 1>}, {transform_indices = @transform_3, window_bounds = array<i64: 1, 128>}, {transform_indices = @transform_4, window_bounds = array<i64: 128, 1>}]} {
    %c0_i32 = arith.constant 0 : i32
    %0 = arith.cmpi eq, %arg1, %c0_i32 : i32
    %1 = arith.extui %0 : i1 to i32
    %c0_i32_0 = arith.constant 0 : i32
    %2 = arith.cmpi ne, %1, %c0_i32_0 : i32
    scf.if %2 {
      %cst_35 = arith.constant 0xFF800000 : f32
      %63 = vector.broadcast %cst_35 : f32 to vector<128x1xf32>
      %c0_36 = arith.constant 0 : index
      %c0_37 = arith.constant 0 : index
      %64 = vector.load %arg7[%c0_36, %c0_37] : memref<128x1xf32, #tpu.memory_space<vmem>>, vector<128x1xf32>
      tpu.vector_store %arg7[%c0_36, %c0_37], %63 {strides = array<i32>} : memref<128x1xf32, #tpu.memory_space<vmem>>, vector<128x1xf32>,
      %cst_38 = arith.constant 0.000000e+00 : f32
      %65 = vector.broadcast %cst_38 : f32 to vector<128x1xf32>
      %c0_39 = arith.constant 0 : index
      %c0_40 = arith.constant 0 : index
      %66 = vector.load %arg8[%c0_39, %c0_40] : memref<128x1xf32, #tpu.memory_space<vmem>>, vector<128x1xf32>
      tpu.vector_store %arg8[%c0_39, %c0_40], %65 {strides = array<i32>} : memref<128x1xf32, #tpu.memory_space<vmem>>, vector<128x1xf32>,
      %cst_41 = arith.constant 0.000000e+00 : f32
      %67 = vector.broadcast %cst_41 : f32 to vector<128x1xf32>
      %c0_42 = arith.constant 0 : index
      %c0_43 = arith.constant 0 : index
      %68 = vector.load %arg9[%c0_42, %c0_43] : memref<128x1xf32, #tpu.memory_space<vmem>>, vector<128x1xf32>
      tpu.vector_store %arg9[%c0_42, %c0_43], %67 {strides = array<i32>} : memref<128x1xf32, #tpu.memory_space<vmem>>, vector<128x1xf32>,
      %cst_44 = arith.constant 0.000000e+00 : f32
      %69 = vector.broadcast %cst_44 : f32 to vector<128x1xf32>
      %c0_45 = arith.constant 0 : index
      %c0_46 = arith.constant 0 : index
      %70 = vector.load %arg10[%c0_45, %c0_46] : memref<128x1xf32, #tpu.memory_space<vmem>>, vector<128x1xf32>
      tpu.vector_store %arg10[%c0_45, %c0_46], %69 {strides = array<i32>} : memref<128x1xf32, #tpu.memory_space<vmem>>, vector<128x1xf32>,
    } else {
    }
    %c0 = arith.constant 0 : index
    %c0_1 = arith.constant 0 : index
    %3 = vector.load %arg2[%c0, %c0_1] : memref<128x128xbf16, #tpu.memory_space<vmem>>, vector<128x128xbf16>
    %c0_2 = arith.constant 0 : index
    %c0_3 = arith.constant 0 : index
    %4 = vector.load %arg3[%c0_2, %c0_3] : memref<128x128xbf16, #tpu.memory_space<vmem>>, vector<128x128xbf16>
    %cst = arith.constant dense<0.000000e+00> : vector<128x128xf32>
    %5 = tpu.matmul %3, %4, %cst {dimension_numbers = #tpu.dot_dimension_numbers<[1], [1], [0], [0], [0, 0, 1, 0], [], []>} : vector<128x128xbf16>, vector<128x128xbf16>, vector<128x128xf32> -> vector<128x128xf32>
    %c0_4 = arith.constant 0 : index
    %c0_5 = arith.constant 0 : index
    %6 = vector.load %arg7[%c0_4, %c0_5] : memref<128x1xf32, #tpu.memory_space<vmem>>, vector<128x1xf32>
    %cst_6 = arith.constant dense<0xFF800000> : vector<128xf32>
    %7 = vector.multi_reduction <maximumf>, %5, %cst_6 [1] : vector<128x128xf32> to vector<128xf32>
    %8 = vector.shape_cast %7 : vector<128xf32> to vector<128x1xf32>
    %9 = arith.maximumf %6, %8 : vector<128x1xf32>
    %10 = arith.subf %6, %9 : vector<128x1xf32>
    %11 = math.exp %10 : vector<128x1xf32>
    %12 = tpu.iota {dimensions = array<i32: 0>} : vector<128x1xi32>
    %c128_i32 = arith.constant 128 : i32
    %13 = arith.muli %arg0, %c128_i32 : i32
    %14 = vector.broadcast %13 : i32 to vector<128x1xi32>
    %15 = arith.addi %12, %14 : vector<128x1xi32>
    %16 = tpu.iota {dimensions = array<i32: 1>} : vector<1x128xi32>
    %c128_i32_7 = arith.constant 128 : i32
    %17 = arith.muli %arg1, %c128_i32_7 : i32
    %18 = vector.broadcast %17 : i32 to vector<1x128xi32>
    %19 = arith.addi %16, %18 : vector<1x128xi32>
    %20 = vector.broadcast %15 : vector<128x1xi32> to vector<128x128xi32>
    %21 = vector.broadcast %19 : vector<1x128xi32> to vector<128x128xi32>
    %22 = arith.cmpi ne, %20, %21 : vector<128x128xi32>
    %c16_i32 = arith.constant 16 : i32
    %23 = vector.broadcast %c16_i32 : i32 to vector<1x128xi32>
    %24 = arith.cmpi slt, %19, %23 : vector<1x128xi32>
    %25 = vector.broadcast %24 : vector<1x128xi1> to vector<128x128xi1>
    %26 = arith.andi %22, %25 : vector<128x128xi1>
    %27 = vector.broadcast %9 : vector<128x1xf32> to vector<128x128xf32>
    %28 = arith.subf %5, %27 : vector<128x128xf32>
    %29 = math.exp %28 : vector<128x128xf32>
    %cst_8 = arith.constant 0.000000e+00 : f32
    %30 = vector.broadcast %cst_8 : f32 to vector<128x128xf32>
    %31 = arith.select %26, %29, %30 : vector<128x128xi1>, vector<128x128xf32>
    %c0_9 = arith.constant 0 : index
    %c0_10 = arith.constant 0 : index
    %32 = vector.load %arg4[%c0_9, %c0_10] : memref<128x1xi32, #tpu.memory_space<vmem>>, vector<128x1xi32>
    %c0_11 = arith.constant 0 : index
    %c0_12 = arith.constant 0 : index
    %33 = vector.load %arg5[%c0_11, %c0_12] : memref<1x128xi32, #tpu.memory_space<vmem>>, vector<1x128xi32>
    %34 = vector.broadcast %32 : vector<128x1xi32> to vector<128x128xi32>
    %35 = vector.broadcast %33 : vector<1x128xi32> to vector<128x128xi32>
    %36 = arith.cmpi eq, %34, %35 : vector<128x128xi32>
    %37 = arith.andi %36, %26 : vector<128x128xi1>
    %c0_13 = arith.constant 0 : index
    %c0_14 = arith.constant 0 : index
    %38 = vector.load %arg8[%c0_13, %c0_14] : memref<128x1xf32, #tpu.memory_space<vmem>>, vector<128x1xf32>
    %39 = arith.mulf %11, %38 : vector<128x1xf32>
    %cst_15 = arith.constant dense<0.000000e+00> : vector<128xf32>
    %40 = vector.multi_reduction <add>, %31, %cst_15 [1] : vector<128x128xf32> to vector<128xf32>
    %41 = vector.shape_cast %40 : vector<128xf32> to vector<128x1xf32>
    %42 = arith.addf %39, %41 : vector<128x1xf32>
    %c0_16 = arith.constant 0 : index
    %c0_17 = arith.constant 0 : index
    %43 = vector.load %arg8[%c0_16, %c0_17] : memref<128x1xf32, #tpu.memory_space<vmem>>, vector<128x1xf32>
    tpu.vector_store %arg8[%c0_16, %c0_17], %42 {strides = array<i32>} : memref<128x1xf32, #tpu.memory_space<vmem>>, vector<128x1xf32>,
    %c0_18 = arith.constant 0 : index
    %c0_19 = arith.constant 0 : index
    %44 = vector.load %arg9[%c0_18, %c0_19] : memref<128x1xf32, #tpu.memory_space<vmem>>, vector<128x1xf32>
    %cst_20 = arith.constant 1.000000e+00 : f32
    %cst_21 = arith.constant 0.000000e+00 : f32
    %45 = vector.broadcast %cst_20 : f32 to vector<128x128xf32>
    %46 = vector.broadcast %cst_21 : f32 to vector<128x128xf32>
    %47 = arith.select %37, %45, %46 : vector<128x128xi1>, vector<128x128xf32>
    %cst_22 = arith.constant dense<0.000000e+00> : vector<128xf32>
    %48 = vector.multi_reduction <add>, %47, %cst_22 [1] : vector<128x128xf32> to vector<128xf32>
    %49 = vector.shape_cast %48 : vector<128xf32> to vector<128x1xf32>
    %50 = arith.addf %44, %49 : vector<128x1xf32>
    %c0_23 = arith.constant 0 : index
    %c0_24 = arith.constant 0 : index
    %51 = vector.load %arg9[%c0_23, %c0_24] : memref<128x1xf32, #tpu.memory_space<vmem>>, vector<128x1xf32>
    tpu.vector_store %arg9[%c0_23, %c0_24], %50 {strides = array<i32>} : memref<128x1xf32, #tpu.memory_space<vmem>>, vector<128x1xf32>,
    %c0_25 = arith.constant 0 : index
    %c0_26 = arith.constant 0 : index
    %52 = vector.load %arg10[%c0_25, %c0_26] : memref<128x1xf32, #tpu.memory_space<vmem>>, vector<128x1xf32>
    %cst_27 = arith.constant 0.000000e+00 : f32
    %53 = vector.broadcast %cst_27 : f32 to vector<128x128xf32>
    %54 = arith.select %37, %5, %53 : vector<128x128xi1>, vector<128x128xf32>
    %cst_28 = arith.constant dense<0.000000e+00> : vector<128xf32>
    %55 = vector.multi_reduction <add>, %54, %cst_28 [1] : vector<128x128xf32> to vector<128xf32>
    %56 = vector.shape_cast %55 : vector<128xf32> to vector<128x1xf32>
    %57 = arith.addf %52, %56 : vector<128x1xf32>
    %c0_29 = arith.constant 0 : index
    %c0_30 = arith.constant 0 : index
    %58 = vector.load %arg10[%c0_29, %c0_30] : memref<128x1xf32, #tpu.memory_space<vmem>>, vector<128x1xf32>
    tpu.vector_store %arg10[%c0_29, %c0_30], %57 {strides = array<i32>} : memref<128x1xf32, #tpu.memory_space<vmem>>, vector<128x1xf32>,
    %c0_31 = arith.constant 0 : index
    %c0_32 = arith.constant 0 : index
    %59 = vector.load %arg7[%c0_31, %c0_32] : memref<128x1xf32, #tpu.memory_space<vmem>>, vector<128x1xf32>
    tpu.vector_store %arg7[%c0_31, %c0_32], %9 {strides = array<i32>} : memref<128x1xf32, #tpu.memory_space<vmem>>, vector<128x1xf32>,
    %c0_i32_33 = arith.constant 0 : i32
    %60 = arith.cmpi eq, %arg1, %c0_i32_33 : i32
    %61 = arith.extui %60 : i1 to i32
    %c0_i32_34 = arith.constant 0 : i32
    %62 = arith.cmpi ne, %61, %c0_i32_34 : i32
    scf.if %62 {
      %c0_35 = arith.constant 0 : index
      %c0_36 = arith.constant 0 : index
      %63 = vector.load %arg9[%c0_35, %c0_36] : memref<128x1xf32, #tpu.memory_space<vmem>>, vector<128x1xf32>
      %cst_37 = arith.constant 9.99999997E-7 : f32
      %64 = vector.broadcast %cst_37 : f32 to vector<128x1xf32>
      %65 = arith.cmpf olt, %63, %64 : vector<128x1xf32>
      %cst_38 = arith.constant 1.000000e+00 : f32
      %66 = vector.broadcast %cst_38 : f32 to vector<128x1xf32>
      %67 = arith.select %65, %66, %63 : vector<128x1xi1>, vector<128x1xf32>
      %c0_39 = arith.constant 0 : index
      %c0_40 = arith.constant 0 : index
      %68 = vector.load %arg7[%c0_39, %c0_40] : memref<128x1xf32, #tpu.memory_space<vmem>>, vector<128x1xf32>
      %c0_41 = arith.constant 0 : index
      %c0_42 = arith.constant 0 : index
      %69 = vector.load %arg8[%c0_41, %c0_42] : memref<128x1xf32, #tpu.memory_space<vmem>>, vector<128x1xf32>
      %70 = math.log %69 : vector<128x1xf32>
      %71 = arith.addf %68, %70 : vector<128x1xf32>
      %c0_43 = arith.constant 0 : index
      %c0_44 = arith.constant 0 : index
      %72 = vector.load %arg10[%c0_43, %c0_44] : memref<128x1xf32, #tpu.memory_space<vmem>>, vector<128x1xf32>
      %73 = arith.mulf %63, %71 : vector<128x1xf32>
      %74 = arith.subf %72, %73 : vector<128x1xf32>
      %75 = tpu.reciprocal %67 {approx = true} : vector<128x1xf32> -> vector<128x1xf32>
      %76 = arith.mulf %74, %75 : vector<128x1xf32>
      %cst_45 = arith.constant -1.000000e+00 : f32
      %77 = vector.broadcast %cst_45 : f32 to vector<128x1xf32>
      %78 = arith.mulf %77, %76 : vector<128x1xf32>
      %c0_46 = arith.constant 0 : index
      %c0_47 = arith.constant 0 : index
      %79 = vector.load %arg6[%c0_46, %c0_47] : memref<128x1xf32, #tpu.memory_space<vmem>>, vector<128x1xf32>
      tpu.vector_store %arg6[%c0_46, %c0_47], %78 {strides = array<i32>} : memref<128x1xf32, #tpu.memory_space<vmem>>, vector<128x1xf32>,
    } else {
    }
    return
  }
  func.func @transform_0(%arg0: i32, %arg1: i32) -> (i32, i32) {
    %c0_i32 = arith.constant 0 : i32
    %c0_i32_0 = arith.constant 0 : i32
    return %arg0, %c0_i32 : i32, i32
  }
  func.func @transform_1(%arg0: i32, %arg1: i32) -> (i32, i32) {
    %c0_i32 = arith.constant 0 : i32
    %c0_i32_0 = arith.constant 0 : i32
    return %arg1, %c0_i32 : i32, i32
  }
  func.func @transform_2(%arg0: i32, %arg1: i32) -> (i32, i32) {
    %c0_i32 = arith.constant 0 : i32
    %c0_i32_0 = arith.constant 0 : i32
    return %arg0, %c0_i32 : i32, i32
  }
  func.func @transform_3(%arg0: i32, %arg1: i32) -> (i32, i32) {
    %c0_i32 = arith.constant 0 : i32
    %c0_i32_0 = arith.constant 0 : i32
    return %c0_i32, %arg1 : i32, i32
  }
  func.func @transform_4(%arg0: i32, %arg1: i32) -> (i32, i32) {
    %c0_i32 = arith.constant 0 : i32
    %c0_i32_0 = arith.constant 0 : i32
    return %arg0, %c0_i32 : i32, i32
  }
}

</mosaic_0001>

<llo_original>
// kernel: tpu_custom_call.1
$region0: #{tpu_custom_call.1}
  #allocation0 [shape = 'u32[]', space=smem, size = 0x4, offset = 0x4, fixed_abs, tag = 'smem constant byte address 0x4 - core index']
  #allocation1 [shape = 'u32[144,128]{1,0:T(1,128)}', space=vmem, size = 0x12000, scoped, tag = 'internal scratch']
  #allocation2 [shape = 'f32[128,1]{1,0:T(8,128)}', space=vmem, size = 0x10000, scoped, tag = 'scratch operand']
  #allocation3 [shape = 'f32[128,1]{1,0:T(8,128)}', space=vmem, size = 0x10000, scoped, tag = 'scratch operand']
  #allocation4 [shape = 'f32[128,1]{1,0:T(8,128)}', space=vmem, size = 0x10000, scoped, tag = 'scratch operand']
  #allocation5 [shape = 'f32[128,1]{1,0:T(8,128)}', space=vmem, size = 0x10000, scoped, tag = 'scratch operand']
  %s0 = inlined_call_operand.vmem [shape: bf16[128,128], index: 0, kind: input, shape index: {}]
  %s1 = inlined_call_operand.vmem [shape: bf16[128,128], index: 1, kind: input, shape index: {}]
  %s2 = inlined_call_operand.vmem [shape: s32[128,1], index: 2, kind: input, shape index: {}]
  %s3 = inlined_call_operand.vmem [shape: s32[1,128], index: 3, kind: input, shape index: {}]
  %s4 = inlined_call_operand.vmem [shape: f32[128,1], index: 4, kind: output, shape index: {}]
  %s5 = sld [smem:[#allocation0]]
  $region34: #{tpu_custom_call.1} parent=0
    _
  %s7 = ssub.s32 1, %s5
  %s8 = scalar_select 0, %s7, %s5
  // Predicated region
  $region2: #{tpu_custom_call.1} parent=0 // pred_check
    _
  $region3: #{tpu_custom_call.1} parent=0 // pred_check_branch
    %10 = sbr.rel (0) target = $region5
  $region4: #{tpu_custom_call.1} parent=0 // pred_region
    _
  $region5: #{tpu_custom_call.1} parent=0 // pred_fallthru
    _
  // Predicated region
  $region6: #{tpu_custom_call.1} parent=0 // pred_check
    _
  $region7: #{tpu_custom_call.1} parent=0 // pred_check_branch
    %12 = sbr.rel (0) target = $region9
  $region8: #{tpu_custom_call.1} parent=0 // pred_region
    _
  $region9: #{tpu_custom_call.1} parent=0 // pred_fallthru
    _
  // Predicated region
  $region10: #{tpu_custom_call.1} parent=0 // pred_check
    _
  $region11: #{tpu_custom_call.1} parent=0 // pred_check_branch
    %14 = sbr.rel (0) target = $region13
  $region12: #{tpu_custom_call.1} parent=0 // pred_region
    _
  $region13: #{tpu_custom_call.1} parent=0 // pred_fallthru
    _
  // Predicated region
  $region14: #{tpu_custom_call.1} parent=0 // pred_check
    _
  $region15: #{tpu_custom_call.1} parent=0 // pred_check_branch
    %16 = sbr.rel (0) target = $region17
  $region16: #{tpu_custom_call.1} parent=0 // pred_region
    _
  $region17: #{tpu_custom_call.1} parent=0 // pred_fallthru
    _
  %p18 = scmp.eq.s32.totalorder 0, 0
  // Predicated region
  $region18: #{tpu_custom_call.1} parent=0 // pred_check
    %p19 = pneg %p18
  $region19: #{tpu_custom_call.1} parent=0 // pred_check_branch
    %21 = sbr.rel (%p19) target = $region21
  $region20: #{tpu_custom_call.1} parent=0 // pred_region
    %vm22 = vcmask 7168
    %23 = vst.msk [vmem:[#allocation2] sm:$0xff] %vm22, -inf
    %24 = vst.msk [vmem:[#allocation2 + $0x8] sm:$0xff] %vm22, -inf
    %25 = vst.msk [vmem:[#allocation2 + $0x10] sm:$0xff] %vm22, -inf
    %26 = vst.msk [vmem:[#allocation2 + $0x18] sm:$0xff] %vm22, -inf
    %27 = vst.msk [vmem:[#allocation2 + $0x20] sm:$0xff] %vm22, -inf
    %28 = vst.msk [vmem:[#allocation2 + $0x28] sm:$0xff] %vm22, -inf
    %29 = vst.msk [vmem:[#allocation2 + $0x30] sm:$0xff] %vm22, -inf
    %30 = vst.msk [vmem:[#allocation2 + $0x38] sm:$0xff] %vm22, -inf
    %31 = vst.msk [vmem:[#allocation2 + $0x40] sm:$0xff] %vm22, -inf
    %32 = vst.msk [vmem:[#allocation2 + $0x48] sm:$0xff] %vm22, -inf
    %33 = vst.msk [vmem:[#allocation2 + $0x50] sm:$0xff] %vm22, -inf
    %34 = vst.msk [vmem:[#allocation2 + $0x58] sm:$0xff] %vm22, -inf
    %35 = vst.msk [vmem:[#allocation2 + $0x60] sm:$0xff] %vm22, -inf
    %36 = vst.msk [vmem:[#allocation2 + $0x68] sm:$0xff] %vm22, -inf
    %37 = vst.msk [vmem:[#allocation2 + $0x70] sm:$0xff] %vm22, -inf
    %38 = vst.msk [vmem:[#allocation2 + $0x78] sm:$0xff] %vm22, -inf
    %39 = vst.msk [vmem:[#allocation3] sm:$0xff] %vm22, 0.0
    %40 = vst.msk [vmem:[#allocation3 + $0x8] sm:$0xff] %vm22, 0.0
    %41 = vst.msk [vmem:[#allocation3 + $0x10] sm:$0xff] %vm22, 0.0
    %42 = vst.msk [vmem:[#allocation3 + $0x18] sm:$0xff] %vm22, 0.0
    %43 = vst.msk [vmem:[#allocation3 + $0x20] sm:$0xff] %vm22, 0.0
    %44 = vst.msk [vmem:[#allocation3 + $0x28] sm:$0xff] %vm22, 0.0
    %45 = vst.msk [vmem:[#allocation3 + $0x30] sm:$0xff] %vm22, 0.0
    %46 = vst.msk [vmem:[#allocation3 + $0x38] sm:$0xff] %vm22, 0.0
    %47 = vst.msk [vmem:[#allocation3 + $0x40] sm:$0xff] %vm22, 0.0
    %48 = vst.msk [vmem:[#allocation3 + $0x48] sm:$0xff] %vm22, 0.0
    %49 = vst.msk [vmem:[#allocation3 + $0x50] sm:$0xff] %vm22, 0.0
    %50 = vst.msk [vmem:[#allocation3 + $0x58] sm:$0xff] %vm22, 0.0
    %51 = vst.msk [vmem:[#allocation3 + $0x60] sm:$0xff] %vm22, 0.0
    %52 = vst.msk [vmem:[#allocation3 + $0x68] sm:$0xff] %vm22, 0.0
    %53 = vst.msk [vmem:[#allocation3 + $0x70] sm:$0xff] %vm22, 0.0
    %54 = vst.msk [vmem:[#allocation3 + $0x78] sm:$0xff] %vm22, 0.0
    %55 = vst.msk [vmem:[#allocation4] sm:$0xff] %vm22, 0.0
    %56 = vst.msk [vmem:[#allocation4 + $0x8] sm:$0xff] %vm22, 0.0
    %57 = vst.msk [vmem:[#allocation4 + $0x10] sm:$0xff] %vm22, 0.0
    %58 = vst.msk [vmem:[#allocation4 + $0x18] sm:$0xff] %vm22, 0.0
    %59 = vst.msk [vmem:[#allocation4 + $0x20] sm:$0xff] %vm22, 0.0
    %60 = vst.msk [vmem:[#allocation4 + $0x28] sm:$0xff] %vm22, 0.0
    %61 = vst.msk [vmem:[#allocation4 + $0x30] sm:$0xff] %vm22, 0.0
    %62 = vst.msk [vmem:[#allocation4 + $0x38] sm:$0xff] %vm22, 0.0
    %63 = vst.msk [vmem:[#allocation4 + $0x40] sm:$0xff] %vm22, 0.0
    %64 = vst.msk [vmem:[#allocation4 + $0x48] sm:$0xff] %vm22, 0.0
    %65 = vst.msk [vmem:[#allocation4 + $0x50] sm:$0xff] %vm22, 0.0
    %66 = vst.msk [vmem:[#allocation4 + $0x58] sm:$0xff] %vm22, 0.0
    %67 = vst.msk [vmem:[#allocation4 + $0x60] sm:$0xff] %vm22, 0.0
    %68 = vst.msk [vmem:[#allocation4 + $0x68] sm:$0xff] %vm22, 0.0
    %69 = vst.msk [vmem:[#allocation4 + $0x70] sm:$0xff] %vm22, 0.0
    %70 = vst.msk [vmem:[#allocation4 + $0x78] sm:$0xff] %vm22, 0.0
    %71 = vst.msk [vmem:[#allocation5] sm:$0xff] %vm22, 0.0
    %72 = vst.msk [vmem:[#allocation5 + $0x8] sm:$0xff] %vm22, 0.0
    %73 = vst.msk [vmem:[#allocation5 + $0x10] sm:$0xff] %vm22, 0.0
    %74 = vst.msk [vmem:[#allocation5 + $0x18] sm:$0xff] %vm22, 0.0
    %75 = vst.msk [vmem:[#allocation5 + $0x20] sm:$0xff] %vm22, 0.0
    %76 = vst.msk [vmem:[#allocation5 + $0x28] sm:$0xff] %vm22, 0.0
    %77 = vst.msk [vmem:[#allocation5 + $0x30] sm:$0xff] %vm22, 0.0
    %78 = vst.msk [vmem:[#allocation5 + $0x38] sm:$0xff] %vm22, 0.0
    %79 = vst.msk [vmem:[#allocation5 + $0x40] sm:$0xff] %vm22, 0.0
    %80 = vst.msk [vmem:[#allocation5 + $0x48] sm:$0xff] %vm22, 0.0
    %81 = vst.msk [vmem:[#allocation5 + $0x50] sm:$0xff] %vm22, 0.0
    %82 = vst.msk [vmem:[#allocation5 + $0x58] sm:$0xff] %vm22, 0.0
    %83 = vst.msk [vmem:[#allocation5 + $0x60] sm:$0xff] %vm22, 0.0
    %84 = vst.msk [vmem:[#allocation5 + $0x68] sm:$0xff] %vm22, 0.0
    %85 = vst.msk [vmem:[#allocation5 + $0x70] sm:$0xff] %vm22, 0.0
    %86 = vst.msk [vmem:[#allocation5 + $0x78] sm:$0xff] %vm22, 0.0
  $region21: #{tpu_custom_call.1} parent=0 // pred_fallthru
    _
  %v87 = vld [vmem:[%s0] sm:$0xf]
  %v88 = vld [vmem:[%s0 + $0x4] sm:$0xf]
  %v89 = vld [vmem:[%s0 + $0x8] sm:$0xf]
  %v90 = vld [vmem:[%s0 + $0xc] sm:$0xf]
  %v91 = vld [vmem:[%s0 + $0x10] sm:$0xf]
  %v92 = vld [vmem:[%s0 + $0x14] sm:$0xf]
  %v93 = vld [vmem:[%s0 + $0x18] sm:$0xf]
  %v94 = vld [vmem:[%s0 + $0x1c] sm:$0xf]
  %v95 = vld [vmem:[%s0 + $0x20] sm:$0xf]
  %v96 = vld [vmem:[%s0 + $0x24] sm:$0xf]
  %v97 = vld [vmem:[%s0 + $0x28] sm:$0xf]
  %v98 = vld [vmem:[%s0 + $0x2c] sm:$0xf]
  %v99 = vld [vmem:[%s0 + $0x30] sm:$0xf]
  %v100 = vld [vmem:[%s0 + $0x34] sm:$0xf]
  %v101 = vld [vmem:[%s0 + $0x38] sm:$0xf]
  %v102 = vld [vmem:[%s0 + $0x3c] sm:$0xf]
  %v103 = vld [vmem:[%s1] sm:$0xf]
  %v104 = vld [vmem:[%s1 + $0x4] sm:$0xf]
  %v105 = vld [vmem:[%s1 + $0x8] sm:$0xf]
  %v106 = vld [vmem:[%s1 + $0xc] sm:$0xf]
  %v107 = vld [vmem:[%s1 + $0x10] sm:$0xf]
  %v108 = vld [vmem:[%s1 + $0x14] sm:$0xf]
  %v109 = vld [vmem:[%s1 + $0x18] sm:$0xf]
  %v110 = vld [vmem:[%s1 + $0x1c] sm:$0xf]
  %v111 = vld [vmem:[%s1 + $0x20] sm:$0xf]
  %v112 = vld [vmem:[%s1 + $0x24] sm:$0xf]
  %v113 = vld [vmem:[%s1 + $0x28] sm:$0xf]
  %v114 = vld [vmem:[%s1 + $0x2c] sm:$0xf]
  %v115 = vld [vmem:[%s1 + $0x30] sm:$0xf]
  %v116 = vld [vmem:[%s1 + $0x34] sm:$0xf]
  %v117 = vld [vmem:[%s1 + $0x38] sm:$0xf]
  %v118 = vld [vmem:[%s1 + $0x3c] sm:$0xf]
  %v135 = vunpack.c.l.b16 %v87
  %v136 = vunpack.c.l.b16 %v88
  %v137 = vunpack.c.l.b16 %v89
  %v138 = vunpack.c.l.b16 %v90
  %v139 = vunpack.c.l.b16 %v91
  %v140 = vunpack.c.l.b16 %v92
  %v141 = vunpack.c.l.b16 %v93
  %v142 = vunpack.c.l.b16 %v94
  %v143 = vunpack.c.l.b16 %v95
  %v144 = vunpack.c.l.b16 %v96
  %v145 = vunpack.c.l.b16 %v97
  %v146 = vunpack.c.l.b16 %v98
  %v147 = vunpack.c.l.b16 %v99
  %v148 = vunpack.c.l.b16 %v100
  %v149 = vunpack.c.l.b16 %v101
  %v150 = vunpack.c.l.b16 %v102
  %v151 = vpack.c.b16 %v136, %v135
  %v152 = vpack.c.b16 %v138, %v137
  %v153 = vpack.c.b16 %v140, %v139
  %v154 = vpack.c.b16 %v142, %v141
  %v155 = vpack.c.b16 %v144, %v143
  %v156 = vpack.c.b16 %v146, %v145
  %v157 = vpack.c.b16 %v148, %v147
  %v158 = vpack.c.b16 %v150, %v149
  %v183 = vunpack.c.l.b16 %v103
  %v184 = vunpack.c.l.b16 %v104
  %v185 = vunpack.c.l.b16 %v105
  %v186 = vunpack.c.l.b16 %v106
  %v187 = vunpack.c.l.b16 %v107
  %v188 = vunpack.c.l.b16 %v108
  %v189 = vunpack.c.l.b16 %v109
  %v190 = vunpack.c.l.b16 %v110
  %v191 = vunpack.c.l.b16 %v111
  %v192 = vunpack.c.l.b16 %v112
  %v193 = vunpack.c.l.b16 %v113
  %v194 = vunpack.c.l.b16 %v114
  %v195 = vunpack.c.l.b16 %v115
  %v196 = vunpack.c.l.b16 %v116
  %v197 = vunpack.c.l.b16 %v117
  %v198 = vunpack.c.l.b16 %v118
  %v199 = vpack.c.b16 %v184, %v183
  %v200 = vpack.c.b16 %v186, %v185
  %v201 = vpack.c.b16 %v188, %v187
  %v202 = vpack.c.b16 %v190, %v189
  %v203 = vpack.c.b16 %v192, %v191
  %v204 = vpack.c.b16 %v194, %v193
  %v205 = vpack.c.b16 %v196, %v195
  %v206 = vpack.c.b16 %v198, %v197
  %215 = vmatprep.subr.bf16.mxu0 0
  %216 = vmatpush1.bf16.xpose.msra.mxu0 %v199
  %217 = vmatprep.subr.bf16.mxu0 0
  %218 = vmatpush1.bf16.xpose.msra.mxu0 %v200
  %219 = vmatprep.subr.bf16.mxu0 0
  %220 = vmatpush1.bf16.xpose.msra.mxu0 %v201
  %221 = vmatprep.subr.bf16.mxu0 0
  %222 = vmatpush1.bf16.xpose.msra.mxu0 %v202
  %223 = vmatprep.subr.bf16.mxu0 0
  %224 = vmatpush1.bf16.xpose.msra.mxu0 %v203
  %225 = vmatprep.subr.bf16.mxu0 0
  %226 = vmatpush1.bf16.xpose.msra.mxu0 %v204
  %227 = vmatprep.subr.bf16.mxu0 0
  %228 = vmatpush1.bf16.xpose.msra.mxu0 %v205
  %229 = vmatprep.subr.bf16.mxu0 0
  %230 = vmatpush1.bf16.xpose.msra.mxu0 %v206
  %231 = vmatprep.subr.bf16.mxu0 0
  %232 = vmatpush1.bf16.xpose.msra.mxu0 0
  %233 = vmatprep.subr.bf16.mxu0 0
  %234 = vmatpush1.bf16.xpose.msra.mxu0 0
  %235 = vmatprep.subr.bf16.mxu0 0
  %236 = vmatpush1.bf16.xpose.msra.mxu0 0
  %237 = vmatprep.subr.bf16.mxu0 0
  %238 = vmatpush1.bf16.xpose.msra.mxu0 0
  %239 = vmatprep.subr.bf16.mxu0 0
  %240 = vmatpush1.bf16.xpose.msra.mxu0 0
  %241 = vmatprep.subr.bf16.mxu0 0
  %242 = vmatpush1.bf16.xpose.msra.mxu0 0
  %243 = vmatprep.subr.bf16.mxu0 0
  %244 = vmatpush1.bf16.xpose.msra.mxu0 0
  %245 = vmatprep.subr.bf16.mxu0 0
  %246 = vmatpush1.bf16.xpose.msra.mxu0 0
  %247 = vmatprep.mubr.bf16.mxu0 0
  %248 = vmatmul.mubr.bf16.gmra.mrb[0].mxu0 %v151
  %v249 = vpop.f32.mrb[0].mxu0
  %v250 = vadd.f32 0.0, %v249
  %v251 = vpop.f32.mrb[0].mxu0
  %v252 = vpop.f32.mrb[0].mxu0
  %v253 = vadd.f32 0.0, %v252
  %v254 = vpop.f32.mrb[0].mxu0
  %255 = vmatprep.mubr.bf16.mxu0 0
  %256 = vmatmul.mubr.bf16.gmra.mrb[0].mxu0 %v152
  %v257 = vpop.f32.mrb[0].mxu0
  %v258 = vadd.f32 0.0, %v257
  %v259 = vpop.f32.mrb[0].mxu0
  %v260 = vpop.f32.mrb[0].mxu0
  %v261 = vadd.f32 0.0, %v260
  %v262 = vpop.f32.mrb[0].mxu0
  %263 = vmatprep.mubr.bf16.mxu0 0
  %264 = vmatmul.mubr.bf16.gmra.mrb[0].mxu0 %v153
  %v265 = vpop.f32.mrb[0].mxu0
  %v266 = vadd.f32 0.0, %v265
  %v267 = vpop.f32.mrb[0].mxu0
  %v268 = vpop.f32.mrb[0].mxu0
  %v269 = vadd.f32 0.0, %v268
  %v270 = vpop.f32.mrb[0].mxu0
  %271 = vmatprep.mubr.bf16.mxu0 0
  %272 = vmatmul.mubr.bf16.gmra.mrb[0].mxu0 %v154
  %v273 = vpop.f32.mrb[0].mxu0
  %v274 = vadd.f32 0.0, %v273
  %v275 = vpop.f32.mrb[0].mxu0
  %v276 = vpop.f32.mrb[0].mxu0
  %v277 = vadd.f32 0.0, %v276
  %v278 = vpop.f32.mrb[0].mxu0
  %279 = vmatprep.mubr.bf16.mxu0 0
  %280 = vmatmul.mubr.bf16.gmra.mrb[0].mxu0 %v155
  %v281 = vpop.f32.mrb[0].mxu0
  %v282 = vadd.f32 0.0, %v281
  %v283 = vpop.f32.mrb[0].mxu0
  %v284 = vpop.f32.mrb[0].mxu0
  %v285 = vadd.f32 0.0, %v284
  %v286 = vpop.f32.mrb[0].mxu0
  %287 = vmatprep.mubr.bf16.mxu0 0
  %288 = vmatmul.mubr.bf16.gmra.mrb[0].mxu0 %v156
  %v289 = vpop.f32.mrb[0].mxu0
  %v290 = vadd.f32 0.0, %v289
  %v291 = vpop.f32.mrb[0].mxu0
  %v292 = vpop.f32.mrb[0].mxu0
  %v293 = vadd.f32 0.0, %v292
  %v294 = vpop.f32.mrb[0].mxu0
  %295 = vmatprep.mubr.bf16.mxu0 0
  %296 = vmatmul.mubr.bf16.gmra.mrb[0].mxu0 %v157
  %v297 = vpop.f32.mrb[0].mxu0
  %v298 = vadd.f32 0.0, %v297
  %v299 = vpop.f32.mrb[0].mxu0
  %v300 = vpop.f32.mrb[0].mxu0
  %v301 = vadd.f32 0.0, %v300
  %v302 = vpop.f32.mrb[0].mxu0
  %303 = vmatprep.mubr.bf16.mxu0 0
  %304 = vmatmul.mubr.bf16.gmra.mrb[0].mxu0 %v158
  %v305 = vpop.f32.mrb[0].mxu0
  %v306 = vadd.f32 0.0, %v305
  %v307 = vpop.f32.mrb[0].mxu0
  %v308 = vpop.f32.mrb[0].mxu0
  %v309 = vadd.f32 0.0, %v308
  %v310 = vpop.f32.mrb[0].mxu0
  %311 = vdwg.mxu0
  %v312 = vld [vmem:[#allocation2] sm:$0xff]
  %v313 = vld [vmem:[#allocation2 + $0x8] sm:$0xff]
  %v314 = vld [vmem:[#allocation2 + $0x10] sm:$0xff]
  %v315 = vld [vmem:[#allocation2 + $0x18] sm:$0xff]
  %v316 = vld [vmem:[#allocation2 + $0x20] sm:$0xff]
  %v317 = vld [vmem:[#allocation2 + $0x28] sm:$0xff]
  %v318 = vld [vmem:[#allocation2 + $0x30] sm:$0xff]
  %v319 = vld [vmem:[#allocation2 + $0x38] sm:$0xff]
  %v320 = vld [vmem:[#allocation2 + $0x40] sm:$0xff]
  %v321 = vld [vmem:[#allocation2 + $0x48] sm:$0xff]
  %v322 = vld [vmem:[#allocation2 + $0x50] sm:$0xff]
  %v323 = vld [vmem:[#allocation2 + $0x58] sm:$0xff]
  %v324 = vld [vmem:[#allocation2 + $0x60] sm:$0xff]
  %v325 = vld [vmem:[#allocation2 + $0x68] sm:$0xff]
  %v326 = vld [vmem:[#allocation2 + $0x70] sm:$0xff]
  %v327 = vld [vmem:[#allocation2 + $0x78] sm:$0xff]
  %328 = vmax.xlane.f32.xlu0 %v250
  %v329 = vpop.xlane.xlu0 %328
  %330 = vmax.xlane.f32.xlu0 %v253
  %v331 = vpop.xlane.xlu0 %330
  %332 = vmax.xlane.f32.xlu0 %v258
  %v333 = vpop.xlane.xlu0 %332
  %334 = vmax.xlane.f32.xlu0 %v261
  %v335 = vpop.xlane.xlu0 %334
  %336 = vmax.xlane.f32.xlu0 %v266
  %v337 = vpop.xlane.xlu0 %336
  %338 = vmax.xlane.f32.xlu0 %v269
  %v339 = vpop.xlane.xlu0 %338
  %340 = vmax.xlane.f32.xlu0 %v274
  %v341 = vpop.xlane.xlu0 %340
  %342 = vmax.xlane.f32.xlu0 %v277
  %v343 = vpop.xlane.xlu0 %342
  %344 = vmax.xlane.f32.xlu0 %v282
  %v345 = vpop.xlane.xlu0 %344
  %346 = vmax.xlane.f32.xlu0 %v285
  %v347 = vpop.xlane.xlu0 %346
  %348 = vmax.xlane.f32.xlu0 %v290
  %v349 = vpop.xlane.xlu0 %348
  %350 = vmax.xlane.f32.xlu0 %v293
  %v351 = vpop.xlane.xlu0 %350
  %352 = vmax.xlane.f32.xlu0 %v298
  %v353 = vpop.xlane.xlu0 %352
  %354 = vmax.xlane.f32.xlu0 %v301
  %v355 = vpop.xlane.xlu0 %354
  %356 = vmax.xlane.f32.xlu0 %v306
  %v357 = vpop.xlane.xlu0 %356
  %358 = vmax.xlane.f32.xlu0 %v309
  %v359 = vpop.xlane.xlu0 %358
  %v360 = vmax.f32 %v312, %v329
  %v361 = vmax.f32 %v313, %v331
  %v362 = vmax.f32 %v314, %v333
  %v363 = vmax.f32 %v315, %v335
  %v364 = vmax.f32 %v316, %v337
  %v365 = vmax.f32 %v317, %v339
  %v366 = vmax.f32 %v318, %v341
  %v367 = vmax.f32 %v319, %v343
  %v368 = vmax.f32 %v320, %v345
  %v369 = vmax.f32 %v321, %v347
  %v370 = vmax.f32 %v322, %v349
  %v371 = vmax.f32 %v323, %v351
  %v372 = vmax.f32 %v324, %v353
  %v373 = vmax.f32 %v325, %v355
  %v374 = vmax.f32 %v326, %v357
  %v375 = vmax.f32 %v327, %v359
  %v376 = vsub.f32 %v312, %v360
  %v377 = vsub.f32 %v313, %v361
  %v378 = vsub.f32 %v314, %v362
  %v379 = vsub.f32 %v315, %v363
  %v380 = vsub.f32 %v316, %v364
  %v381 = vsub.f32 %v317, %v365
  %v382 = vsub.f32 %v318, %v366
  %v383 = vsub.f32 %v319, %v367
  %v384 = vsub.f32 %v320, %v368
  %v385 = vsub.f32 %v321, %v369
  %v386 = vsub.f32 %v322, %v370
  %v387 = vsub.f32 %v323, %v371
  %v388 = vsub.f32 %v324, %v372
  %v389 = vsub.f32 %v325, %v373
  %v390 = vsub.f32 %v326, %v374
  %v391 = vsub.f32 %v327, %v375
  %v392 = vmul.f32 %v376, 1.442695
  %v393 = vpow.pop %v392
  %v394 = vmul.f32 %v377, 1.442695
  %v395 = vpow.pop %v394
  %v396 = vmul.f32 %v378, 1.442695
  %v397 = vpow.pop %v396
  %v398 = vmul.f32 %v379, 1.442695
  %v399 = vpow.pop %v398
  %v400 = vmul.f32 %v380, 1.442695
  %v401 = vpow.pop %v400
  %v402 = vmul.f32 %v381, 1.442695
  %v403 = vpow.pop %v402
  %v404 = vmul.f32 %v382, 1.442695
  %v405 = vpow.pop %v404
  %v406 = vmul.f32 %v383, 1.442695
  %v407 = vpow.pop %v406
  %v408 = vmul.f32 %v384, 1.442695
  %v409 = vpow.pop %v408
  %v410 = vmul.f32 %v385, 1.442695
  %v411 = vpow.pop %v410
  %v412 = vmul.f32 %v386, 1.442695
  %v413 = vpow.pop %v412
  %v414 = vmul.f32 %v387, 1.442695
  %v415 = vpow.pop %v414
  %v416 = vmul.f32 %v388, 1.442695
  %v417 = vpow.pop %v416
  %v418 = vmul.f32 %v389, 1.442695
  %v419 = vpow.pop %v418
  %v420 = vmul.f32 %v390, 1.442695
  %v421 = vpow.pop %v420
  %v422 = vmul.f32 %v391, 1.442695
  %v423 = vpow.pop %v422
  %v424 = vlaneseq
  %v425 = vshrl.u32 %v424, 7
  %v426 = vadd.s32 %v425, 8
  %v427 = vadd.s32 %v425, 16
  %v428 = vadd.s32 %v425, 24
  %v429 = vadd.s32 %v425, 32
  %v430 = vadd.s32 %v425, 40
  %v431 = vadd.s32 %v425, 48
  %v432 = vadd.s32 %v425, 56
  %v433 = vadd.s32 %v425, 64
  %v434 = vadd.s32 %v425, 72
  %v435 = vadd.s32 %v425, 80
  %v436 = vadd.s32 %v425, 88
  %v437 = vadd.s32 %v425, 96
  %v438 = vadd.s32 %v425, 104
  %v439 = vadd.s32 %v425, 112
  %v440 = vadd.s32 %v425, 120
  %s441 = smul.u32 0, 128
  %v442 = vstv %s441
  %v443 = vadd.s32 %v425, %v442
  %v444 = vadd.s32 %v426, %v442
  %v445 = vadd.s32 %v427, %v442
  %v446 = vadd.s32 %v428, %v442
  %v447 = vadd.s32 %v429, %v442
  %v448 = vadd.s32 %v430, %v442
  %v449 = vadd.s32 %v431, %v442
  %v450 = vadd.s32 %v432, %v442
  %v451 = vadd.s32 %v433, %v442
  %v452 = vadd.s32 %v434, %v442
  %v453 = vadd.s32 %v435, %v442
  %v454 = vadd.s32 %v436, %v442
  %v455 = vadd.s32 %v437, %v442
  %v456 = vadd.s32 %v438, %v442
  %v457 = vadd.s32 %v439, %v442
  %v458 = vadd.s32 %v440, %v442
  %v459 = vlaneseq
  %v460 = vand.u32 %v459, 127
  %s461 = smul.u32 0, 128
  %v462 = vstv %s461
  %v463 = vadd.s32 %v460, %v462
  %vm464 = vcmp.ne.s32.totalorder %v443, %v463
  %vm465 = vcmp.ne.s32.totalorder %v444, %v463
  %vm466 = vcmp.ne.s32.totalorder %v445, %v463
  %vm467 = vcmp.ne.s32.totalorder %v446, %v463
  %vm468 = vcmp.ne.s32.totalorder %v447, %v463
  %vm469 = vcmp.ne.s32.totalorder %v448, %v463
  %vm470 = vcmp.ne.s32.totalorder %v449, %v463
  %vm471 = vcmp.ne.s32.totalorder %v450, %v463
  %vm472 = vcmp.ne.s32.totalorder %v451, %v463
  %vm473 = vcmp.ne.s32.totalorder %v452, %v463
  %vm474 = vcmp.ne.s32.totalorder %v453, %v463
  %vm475 = vcmp.ne.s32.totalorder %v454, %v463
  %vm476 = vcmp.ne.s32.totalorder %v455, %v463
  %vm477 = vcmp.ne.s32.totalorder %v456, %v463
  %vm478 = vcmp.ne.s32.totalorder %v457, %v463
  %vm479 = vcmp.ne.s32.totalorder %v458, %v463
  %vm480 = vcmp.lt.s32.totalorder %v463, 16
  %v481 = vsel %vm480, 1, 0
  %vm482 = vcmp.eq.s32.totalorder %v481, 1
  %vm483 = vmand %vm464, %vm482
  %vm484 = vmand %vm465, %vm482
  %vm485 = vmand %vm466, %vm482
  %vm486 = vmand %vm467, %vm482
  %vm487 = vmand %vm468, %vm482
  %vm488 = vmand %vm469, %vm482
  %vm489 = vmand %vm470, %vm482
  %vm490 = vmand %vm471, %vm482
  %vm491 = vmand %vm472, %vm482
  %vm492 = vmand %vm473, %vm482
  %vm493 = vmand %vm474, %vm482
  %vm494 = vmand %vm475, %vm482
  %vm495 = vmand %vm476, %vm482
  %vm496 = vmand %vm477, %vm482
  %vm497 = vmand %vm478, %vm482
  %vm498 = vmand %vm479, %vm482
  %500 = vset.pattern.permute.xlu0 0
  %501 = vperm.xlu0 %500, %v360
  %v502 = vpop.permute.xlu0 %501
  %505 = vset.pattern.permute.xlu0 0
  %506 = vperm.xlu0 %505, %v361
  %v507 = vpop.permute.xlu0 %506
  %510 = vset.pattern.permute.xlu0 0
  %511 = vperm.xlu0 %510, %v362
  %v512 = vpop.permute.xlu0 %511
  %515 = vset.pattern.permute.xlu0 0
  %516 = vperm.xlu0 %515, %v363
  %v517 = vpop.permute.xlu0 %516
  %520 = vset.pattern.permute.xlu0 0
  %521 = vperm.xlu0 %520, %v364
  %v522 = vpop.permute.xlu0 %521
  %525 = vset.pattern.permute.xlu0 0
  %526 = vperm.xlu0 %525, %v365
  %v527 = vpop.permute.xlu0 %526
  %530 = vset.pattern.permute.xlu0 0
  %531 = vperm.xlu0 %530, %v366
  %v532 = vpop.permute.xlu0 %531
  %535 = vset.pattern.permute.xlu0 0
  %536 = vperm.xlu0 %535, %v367
  %v537 = vpop.permute.xlu0 %536
  %540 = vset.pattern.permute.xlu0 0
  %541 = vperm.xlu0 %540, %v368
  %v542 = vpop.permute.xlu0 %541
  %545 = vset.pattern.permute.xlu0 0
  %546 = vperm.xlu0 %545, %v369
  %v547 = vpop.permute.xlu0 %546
  %550 = vset.pattern.permute.xlu0 0
  %551 = vperm.xlu0 %550, %v370
  %v552 = vpop.permute.xlu0 %551
  %555 = vset.pattern.permute.xlu0 0
  %556 = vperm.xlu0 %555, %v371
  %v557 = vpop.permute.xlu0 %556
  %560 = vset.pattern.permute.xlu0 0
  %561 = vperm.xlu0 %560, %v372
  %v562 = vpop.permute.xlu0 %561
  %565 = vset.pattern.permute.xlu0 0
  %566 = vperm.xlu0 %565, %v373
  %v567 = vpop.permute.xlu0 %566
  %570 = vset.pattern.permute.xlu0 0
  %571 = vperm.xlu0 %570, %v374
  %v572 = vpop.permute.xlu0 %571
  %575 = vset.pattern.permute.xlu0 0
  %576 = vperm.xlu0 %575, %v375
  %v577 = vpop.permute.xlu0 %576
  %v579 = vsub.f32 %v250, %v502
  %v580 = vsub.f32 %v253, %v507
  %v581 = vsub.f32 %v258, %v512
  %v582 = vsub.f32 %v261, %v517
  %v583 = vsub.f32 %v266, %v522
  %v584 = vsub.f32 %v269, %v527
  %v585 = vsub.f32 %v274, %v532
  %v586 = vsub.f32 %v277, %v537
  %v587 = vsub.f32 %v282, %v542
  %v588 = vsub.f32 %v285, %v547
  %v589 = vsub.f32 %v290, %v552
  %v590 = vsub.f32 %v293, %v557
  %v591 = vsub.f32 %v298, %v562
  %v592 = vsub.f32 %v301, %v567
  %v593 = vsub.f32 %v306, %v572
  %v594 = vsub.f32 %v309, %v577
  %v595 = vmul.f32 %v579, 1.442695
  %v596 = vpow.pop %v595
  %v597 = vmul.f32 %v580, 1.442695
  %v598 = vpow.pop %v597
  %v599 = vmul.f32 %v581, 1.442695
  %v600 = vpow.pop %v599
  %v601 = vmul.f32 %v582, 1.442695
  %v602 = vpow.pop %v601
  %v603 = vmul.f32 %v583, 1.442695
  %v604 = vpow.pop %v603
  %v605 = vmul.f32 %v584, 1.442695
  %v606 = vpow.pop %v605
  %v607 = vmul.f32 %v585, 1.442695
  %v608 = vpow.pop %v607
  %v609 = vmul.f32 %v586, 1.442695
  %v610 = vpow.pop %v609
  %v611 = vmul.f32 %v587, 1.442695
  %v612 = vpow.pop %v611
  %v613 = vmul.f32 %v588, 1.442695
  %v614 = vpow.pop %v613
  %v615 = vmul.f32 %v589, 1.442695
  %v616 = vpow.pop %v615
  %v617 = vmul.f32 %v590, 1.442695
  %v618 = vpow.pop %v617
  %v619 = vmul.f32 %v591, 1.442695
  %v620 = vpow.pop %v619
  %v621 = vmul.f32 %v592, 1.442695
  %v622 = vpow.pop %v621
  %v623 = vmul.f32 %v593, 1.442695
  %v624 = vpow.pop %v623
  %v625 = vmul.f32 %v594, 1.442695
  %v626 = vpow.pop %v625
  %v627 = vsel %vm483, %v596, 0.0
  %v628 = vsel %vm484, %v598, 0.0
  %v629 = vsel %vm485, %v600, 0.0
  %v630 = vsel %vm486, %v602, 0.0
  %v631 = vsel %vm487, %v604, 0.0
  %v632 = vsel %vm488, %v606, 0.0
  %v633 = vsel %vm489, %v608, 0.0
  %v634 = vsel %vm490, %v610, 0.0
  %v635 = vsel %vm491, %v612, 0.0
  %v636 = vsel %vm492, %v614, 0.0
  %v637 = vsel %vm493, %v616, 0.0
  %v638 = vsel %vm494, %v618, 0.0
  %v639 = vsel %vm495, %v620, 0.0
  %v640 = vsel %vm496, %v622, 0.0
  %v641 = vsel %vm497, %v624, 0.0
  %v642 = vsel %vm498, %v626, 0.0
  %v643 = vld [vmem:[%s2] sm:$0xff]
  %v644 = vld [vmem:[%s2 + $0x8] sm:$0xff]
  %v645 = vld [vmem:[%s2 + $0x10] sm:$0xff]
  %v646 = vld [vmem:[%s2 + $0x18] sm:$0xff]
  %v647 = vld [vmem:[%s2 + $0x20] sm:$0xff]
  %v648 = vld [vmem:[%s2 + $0x28] sm:$0xff]
  %v649 = vld [vmem:[%s2 + $0x30] sm:$0xff]
  %v650 = vld [vmem:[%s2 + $0x38] sm:$0xff]
  %v651 = vld [vmem:[%s2 + $0x40] sm:$0xff]
  %v652 = vld [vmem:[%s2 + $0x48] sm:$0xff]
  %v653 = vld [vmem:[%s2 + $0x50] sm:$0xff]
  %v654 = vld [vmem:[%s2 + $0x58] sm:$0xff]
  %v655 = vld [vmem:[%s2 + $0x60] sm:$0xff]
  %v656 = vld [vmem:[%s2 + $0x68] sm:$0xff]
  %v657 = vld [vmem:[%s2 + $0x70] sm:$0xff]
  %v658 = vld [vmem:[%s2 + $0x78] sm:$0xff]
  %v659 = vld [vmem:[%s3] sm:$0x1]
  %660 = vset.pattern.permute.xlu0 0
  %661 = vperm.xlu0 %660, %v643
  %v662 = vpop.permute.xlu0 %661
  %663 = vset.pattern.permute.xlu0 0
  %664 = vperm.xlu0 %663, %v644
  %v665 = vpop.permute.xlu0 %664
  %666 = vset.pattern.permute.xlu0 0
  %667 = vperm.xlu0 %666, %v645
  %v668 = vpop.permute.xlu0 %667
  %669 = vset.pattern.permute.xlu0 0
  %670 = vperm.xlu0 %669, %v646
  %v671 = vpop.permute.xlu0 %670
  %672 = vset.pattern.permute.xlu0 0
  %673 = vperm.xlu0 %672, %v647
  %v674 = vpop.permute.xlu0 %673
  %675 = vset.pattern.permute.xlu0 0
  %676 = vperm.xlu0 %675, %v648
  %v677 = vpop.permute.xlu0 %676
  %678 = vset.pattern.permute.xlu0 0
  %679 = vperm.xlu0 %678, %v649
  %v680 = vpop.permute.xlu0 %679
  %681 = vset.pattern.permute.xlu0 0
  %682 = vperm.xlu0 %681, %v650
  %v683 = vpop.permute.xlu0 %682
  %684 = vset.pattern.permute.xlu0 0
  %685 = vperm.xlu0 %684, %v651
  %v686 = vpop.permute.xlu0 %685
  %687 = vset.pattern.permute.xlu0 0
  %688 = vperm.xlu0 %687, %v652
  %v689 = vpop.permute.xlu0 %688
  %690 = vset.pattern.permute.xlu0 0
  %691 = vperm.xlu0 %690, %v653
  %v692 = vpop.permute.xlu0 %691
  %693 = vset.pattern.permute.xlu0 0
  %694 = vperm.xlu0 %693, %v654
  %v695 = vpop.permute.xlu0 %694
  %696 = vset.pattern.permute.xlu0 0
  %697 = vperm.xlu0 %696, %v655
  %v698 = vpop.permute.xlu0 %697
  %699 = vset.pattern.permute.xlu0 0
  %700 = vperm.xlu0 %699, %v656
  %v701 = vpop.permute.xlu0 %700
  %702 = vset.pattern.permute.xlu0 0
  %703 = vperm.xlu0 %702, %v657
  %v704 = vpop.permute.xlu0 %703
  %705 = vset.pattern.permute.xlu0 0
  %706 = vperm.xlu0 %705, %v658
  %v707 = vpop.permute.xlu0 %706
  %v708 = vlaneseq
  %v709 = vshrl.u32 %v708, 7
  %v710 = vsub.s32 0, %v709
  %v711 = vrot.slane %v659, %v710
  %vm712 = vcmp.eq.s32.totalorder %v662, %v711
  %vm713 = vcmp.eq.s32.totalorder %v665, %v711
  %vm714 = vcmp.eq.s32.totalorder %v668, %v711
  %vm715 = vcmp.eq.s32.totalorder %v671, %v711
  %vm716 = vcmp.eq.s32.totalorder %v674, %v711
  %vm717 = vcmp.eq.s32.totalorder %v677, %v711
  %vm718 = vcmp.eq.s32.totalorder %v680, %v711
  %vm719 = vcmp.eq.s32.totalorder %v683, %v711
  %vm720 = vcmp.eq.s32.totalorder %v686, %v711
  %vm721 = vcmp.eq.s32.totalorder %v689, %v711
  %vm722 = vcmp.eq.s32.totalorder %v692, %v711
  %vm723 = vcmp.eq.s32.totalorder %v695, %v711
  %vm724 = vcmp.eq.s32.totalorder %v698, %v711
  %vm725 = vcmp.eq.s32.totalorder %v701, %v711
  %vm726 = vcmp.eq.s32.totalorder %v704, %v711
  %vm727 = vcmp.eq.s32.totalorder %v707, %v711
  %vm728 = vmand %vm712, %vm483
  %vm729 = vmand %vm713, %vm484
  %vm730 = vmand %vm714, %vm485
  %vm731 = vmand %vm715, %vm486
  %vm732 = vmand %vm716, %vm487
  %vm733 = vmand %vm717, %vm488
  %vm734 = vmand %vm718, %vm489
  %vm735 = vmand %vm719, %vm490
  %vm736 = vmand %vm720, %vm491
  %vm737 = vmand %vm721, %vm492
  %vm738 = vmand %vm722, %vm493
  %vm739 = vmand %vm723, %vm494
  %vm740 = vmand %vm724, %vm495
  %vm741 = vmand %vm725, %vm496
  %vm742 = vmand %vm726, %vm497
  %vm743 = vmand %vm727, %vm498
  %v744 = vld [vmem:[#allocation3] sm:$0xff]
  %v745 = vld [vmem:[#allocation3 + $0x8] sm:$0xff]
  %v746 = vld [vmem:[#allocation3 + $0x10] sm:$0xff]
  %v747 = vld [vmem:[#allocation3 + $0x18] sm:$0xff]
  %v748 = vld [vmem:[#allocation3 + $0x20] sm:$0xff]
  %v749 = vld [vmem:[#allocation3 + $0x28] sm:$0xff]
  %v750 = vld [vmem:[#allocation3 + $0x30] sm:$0xff]
  %v751 = vld [vmem:[#allocation3 + $0x38] sm:$0xff]
  %v752 = vld [vmem:[#allocation3 + $0x40] sm:$0xff]
  %v753 = vld [vmem:[#allocation3 + $0x48] sm:$0xff]
  %v754 = vld [vmem:[#allocation3 + $0x50] sm:$0xff]
  %v755 = vld [vmem:[#allocation3 + $0x58] sm:$0xff]
  %v756 = vld [vmem:[#allocation3 + $0x60] sm:$0xff]
  %v757 = vld [vmem:[#allocation3 + $0x68] sm:$0xff]
  %v758 = vld [vmem:[#allocation3 + $0x70] sm:$0xff]
  %v759 = vld [vmem:[#allocation3 + $0x78] sm:$0xff]
  %v760 = vmul.f32 %v393, %v744
  %v761 = vmul.f32 %v395, %v745
  %v762 = vmul.f32 %v397, %v746
  %v763 = vmul.f32 %v399, %v747
  %v764 = vmul.f32 %v401, %v748
  %v765 = vmul.f32 %v403, %v749
  %v766 = vmul.f32 %v405, %v750
  %v767 = vmul.f32 %v407, %v751
  %v768 = vmul.f32 %v409, %v752
  %v769 = vmul.f32 %v411, %v753
  %v770 = vmul.f32 %v413, %v754
  %v771 = vmul.f32 %v415, %v755
  %v772 = vmul.f32 %v417, %v756
  %v773 = vmul.f32 %v419, %v757
  %v774 = vmul.f32 %v421, %v758
  %v775 = vmul.f32 %v423, %v759
  %776 = vadd.xlane.f32.xlu0 %v627
  %v777 = vpop.xlane.xlu0 %776
  %778 = vadd.xlane.f32.xlu0 %v628
  %v779 = vpop.xlane.xlu0 %778
  %780 = vadd.xlane.f32.xlu0 %v629
  %v781 = vpop.xlane.xlu0 %780
  %782 = vadd.xlane.f32.xlu0 %v630
  %v783 = vpop.xlane.xlu0 %782
  %784 = vadd.xlane.f32.xlu0 %v631
  %v785 = vpop.xlane.xlu0 %784
  %786 = vadd.xlane.f32.xlu0 %v632
  %v787 = vpop.xlane.xlu0 %786
  %788 = vadd.xlane.f32.xlu0 %v633
  %v789 = vpop.xlane.xlu0 %788
  %790 = vadd.xlane.f32.xlu0 %v634
  %v791 = vpop.xlane.xlu0 %790
  %792 = vadd.xlane.f32.xlu0 %v635
  %v793 = vpop.xlane.xlu0 %792
  %794 = vadd.xlane.f32.xlu0 %v636
  %v795 = vpop.xlane.xlu0 %794
  %796 = vadd.xlane.f32.xlu0 %v637
  %v797 = vpop.xlane.xlu0 %796
  %798 = vadd.xlane.f32.xlu0 %v638
  %v799 = vpop.xlane.xlu0 %798
  %800 = vadd.xlane.f32.xlu0 %v639
  %v801 = vpop.xlane.xlu0 %800
  %802 = vadd.xlane.f32.xlu0 %v640
  %v803 = vpop.xlane.xlu0 %802
  %804 = vadd.xlane.f32.xlu0 %v641
  %v805 = vpop.xlane.xlu0 %804
  %806 = vadd.xlane.f32.xlu0 %v642
  %v807 = vpop.xlane.xlu0 %806
  %v808 = vadd.f32 %v760, %v777
  %v809 = vadd.f32 %v761, %v779
  %v810 = vadd.f32 %v762, %v781
  %v811 = vadd.f32 %v763, %v783
  %v812 = vadd.f32 %v764, %v785
  %v813 = vadd.f32 %v765, %v787
  %v814 = vadd.f32 %v766, %v789
  %v815 = vadd.f32 %v767, %v791
  %v816 = vadd.f32 %v768, %v793
  %v817 = vadd.f32 %v769, %v795
  %v818 = vadd.f32 %v770, %v797
  %v819 = vadd.f32 %v771, %v799
  %v820 = vadd.f32 %v772, %v801
  %v821 = vadd.f32 %v773, %v803
  %v822 = vadd.f32 %v774, %v805
  %v823 = vadd.f32 %v775, %v807
  %vm824 = vcmask 7168
  %825 = vst.msk [vmem:[#allocation3] sm:$0xff] %vm824, %v808
  %826 = vst.msk [vmem:[#allocation3 + $0x8] sm:$0xff] %vm824, %v809
  %827 = vst.msk [vmem:[#allocation3 + $0x10] sm:$0xff] %vm824, %v810
  %828 = vst.msk [vmem:[#allocation3 + $0x18] sm:$0xff] %vm824, %v811
  %829 = vst.msk [vmem:[#allocation3 + $0x20] sm:$0xff] %vm824, %v812
  %830 = vst.msk [vmem:[#allocation3 + $0x28] sm:$0xff] %vm824, %v813
  %831 = vst.msk [vmem:[#allocation3 + $0x30] sm:$0xff] %vm824, %v814
  %832 = vst.msk [vmem:[#allocation3 + $0x38] sm:$0xff] %vm824, %v815
  %833 = vst.msk [vmem:[#allocation3 + $0x40] sm:$0xff] %vm824, %v816
  %834 = vst.msk [vmem:[#allocation3 + $0x48] sm:$0xff] %vm824, %v817
  %835 = vst.msk [vmem:[#allocation3 + $0x50] sm:$0xff] %vm824, %v818
  %836 = vst.msk [vmem:[#allocation3 + $0x58] sm:$0xff] %vm824, %v819
  %837 = vst.msk [vmem:[#allocation3 + $0x60] sm:$0xff] %vm824, %v820
  %838 = vst.msk [vmem:[#allocation3 + $0x68] sm:$0xff] %vm824, %v821
  %839 = vst.msk [vmem:[#allocation3 + $0x70] sm:$0xff] %vm824, %v822
  %840 = vst.msk [vmem:[#allocation3 + $0x78] sm:$0xff] %vm824, %v823
  %v841 = vld [vmem:[#allocation4] sm:$0xff]
  %v842 = vld [vmem:[#allocation4 + $0x8] sm:$0xff]
  %v843 = vld [vmem:[#allocation4 + $0x10] sm:$0xff]
  %v844 = vld [vmem:[#allocation4 + $0x18] sm:$0xff]
  %v845 = vld [vmem:[#allocation4 + $0x20] sm:$0xff]
  %v846 = vld [vmem:[#allocation4 + $0x28] sm:$0xff]
  %v847 = vld [vmem:[#allocation4 + $0x30] sm:$0xff]
  %v848 = vld [vmem:[#allocation4 + $0x38] sm:$0xff]
  %v849 = vld [vmem:[#allocation4 + $0x40] sm:$0xff]
  %v850 = vld [vmem:[#allocation4 + $0x48] sm:$0xff]
  %v851 = vld [vmem:[#allocation4 + $0x50] sm:$0xff]
  %v852 = vld [vmem:[#allocation4 + $0x58] sm:$0xff]
  %v853 = vld [vmem:[#allocation4 + $0x60] sm:$0xff]
  %v854 = vld [vmem:[#allocation4 + $0x68] sm:$0xff]
  %v855 = vld [vmem:[#allocation4 + $0x70] sm:$0xff]
  %v856 = vld [vmem:[#allocation4 + $0x78] sm:$0xff]
  %v857 = vsel %vm728, 1.0, 0.0
  %v858 = vsel %vm729, 1.0, 0.0
  %v859 = vsel %vm730, 1.0, 0.0
  %v860 = vsel %vm731, 1.0, 0.0
  %v861 = vsel %vm732, 1.0, 0.0
  %v862 = vsel %vm733, 1.0, 0.0
  %v863 = vsel %vm734, 1.0, 0.0
  %v864 = vsel %vm735, 1.0, 0.0
  %v865 = vsel %vm736, 1.0, 0.0
  %v866 = vsel %vm737, 1.0, 0.0
  %v867 = vsel %vm738, 1.0, 0.0
  %v868 = vsel %vm739, 1.0, 0.0
  %v869 = vsel %vm740, 1.0, 0.0
  %v870 = vsel %vm741, 1.0, 0.0
  %v871 = vsel %vm742, 1.0, 0.0
  %v872 = vsel %vm743, 1.0, 0.0
  %873 = vadd.xlane.f32.xlu0 %v857
  %v874 = vpop.xlane.xlu0 %873
  %875 = vadd.xlane.f32.xlu0 %v858
  %v876 = vpop.xlane.xlu0 %875
  %877 = vadd.xlane.f32.xlu0 %v859
  %v878 = vpop.xlane.xlu0 %877
  %879 = vadd.xlane.f32.xlu0 %v860
  %v880 = vpop.xlane.xlu0 %879
  %881 = vadd.xlane.f32.xlu0 %v861
  %v882 = vpop.xlane.xlu0 %881
  %883 = vadd.xlane.f32.xlu0 %v862
  %v884 = vpop.xlane.xlu0 %883
  %885 = vadd.xlane.f32.xlu0 %v863
  %v886 = vpop.xlane.xlu0 %885
  %887 = vadd.xlane.f32.xlu0 %v864
  %v888 = vpop.xlane.xlu0 %887
  %889 = vadd.xlane.f32.xlu0 %v865
  %v890 = vpop.xlane.xlu0 %889
  %891 = vadd.xlane.f32.xlu0 %v866
  %v892 = vpop.xlane.xlu0 %891
  %893 = vadd.xlane.f32.xlu0 %v867
  %v894 = vpop.xlane.xlu0 %893
  %895 = vadd.xlane.f32.xlu0 %v868
  %v896 = vpop.xlane.xlu0 %895
  %897 = vadd.xlane.f32.xlu0 %v869
  %v898 = vpop.xlane.xlu0 %897
  %899 = vadd.xlane.f32.xlu0 %v870
  %v900 = vpop.xlane.xlu0 %899
  %901 = vadd.xlane.f32.xlu0 %v871
  %v902 = vpop.xlane.xlu0 %901
  %903 = vadd.xlane.f32.xlu0 %v872
  %v904 = vpop.xlane.xlu0 %903
  %v905 = vadd.f32 %v841, %v874
  %v906 = vadd.f32 %v842, %v876
  %v907 = vadd.f32 %v843, %v878
  %v908 = vadd.f32 %v844, %v880
  %v909 = vadd.f32 %v845, %v882
  %v910 = vadd.f32 %v846, %v884
  %v911 = vadd.f32 %v847, %v886
  %v912 = vadd.f32 %v848, %v888
  %v913 = vadd.f32 %v849, %v890
  %v914 = vadd.f32 %v850, %v892
  %v915 = vadd.f32 %v851, %v894
  %v916 = vadd.f32 %v852, %v896
  %v917 = vadd.f32 %v853, %v898
  %v918 = vadd.f32 %v854, %v900
  %v919 = vadd.f32 %v855, %v902
  %v920 = vadd.f32 %v856, %v904
  %921 = vst.msk [vmem:[#allocation4] sm:$0xff] %vm824, %v905
  %922 = vst.msk [vmem:[#allocation4 + $0x8] sm:$0xff] %vm824, %v906
  %923 = vst.msk [vmem:[#allocation4 + $0x10] sm:$0xff] %vm824, %v907
  %924 = vst.msk [vmem:[#allocation4 + $0x18] sm:$0xff] %vm824, %v908
  %925 = vst.msk [vmem:[#allocation4 + $0x20] sm:$0xff] %vm824, %v909
  %926 = vst.msk [vmem:[#allocation4 + $0x28] sm:$0xff] %vm824, %v910
  %927 = vst.msk [vmem:[#allocation4 + $0x30] sm:$0xff] %vm824, %v911
  %928 = vst.msk [vmem:[#allocation4 + $0x38] sm:$0xff] %vm824, %v912
  %929 = vst.msk [vmem:[#allocation4 + $0x40] sm:$0xff] %vm824, %v913
  %930 = vst.msk [vmem:[#allocation4 + $0x48] sm:$0xff] %vm824, %v914
  %931 = vst.msk [vmem:[#allocation4 + $0x50] sm:$0xff] %vm824, %v915
  %932 = vst.msk [vmem:[#allocation4 + $0x58] sm:$0xff] %vm824, %v916
  %933 = vst.msk [vmem:[#allocation4 + $0x60] sm:$0xff] %vm824, %v917
  %934 = vst.msk [vmem:[#allocation4 + $0x68] sm:$0xff] %vm824, %v918
  %935 = vst.msk [vmem:[#allocation4 + $0x70] sm:$0xff] %vm824, %v919
  %936 = vst.msk [vmem:[#allocation4 + $0x78] sm:$0xff] %vm824, %v920
  %v937 = vld [vmem:[#allocation5] sm:$0xff]
  %v938 = vld [vmem:[#allocation5 + $0x8] sm:$0xff]
  %v939 = vld [vmem:[#allocation5 + $0x10] sm:$0xff]
  %v940 = vld [vmem:[#allocation5 + $0x18] sm:$0xff]
  %v941 = vld [vmem:[#allocation5 + $0x20] sm:$0xff]
  %v942 = vld [vmem:[#allocation5 + $0x28] sm:$0xff]
  %v943 = vld [vmem:[#allocation5 + $0x30] sm:$0xff]
  %v944 = vld [vmem:[#allocation5 + $0x38] sm:$0xff]
  %v945 = vld [vmem:[#allocation5 + $0x40] sm:$0xff]
  %v946 = vld [vmem:[#allocation5 + $0x48] sm:$0xff]
  %v947 = vld [vmem:[#allocation5 + $0x50] sm:$0xff]
  %v948 = vld [vmem:[#allocation5 + $0x58] sm:$0xff]
  %v949 = vld [vmem:[#allocation5 + $0x60] sm:$0xff]
  %v950 = vld [vmem:[#allocation5 + $0x68] sm:$0xff]
  %v951 = vld [vmem:[#allocation5 + $0x70] sm:$0xff]
  %v952 = vld [vmem:[#allocation5 + $0x78] sm:$0xff]
  %v953 = vsel %vm728, %v250, 0.0
  %v954 = vsel %vm729, %v253, 0.0
  %v955 = vsel %vm730, %v258, 0.0
  %v956 = vsel %vm731, %v261, 0.0
  %v957 = vsel %vm732, %v266, 0.0
  %v958 = vsel %vm733, %v269, 0.0
  %v959 = vsel %vm734, %v274, 0.0
  %v960 = vsel %vm735, %v277, 0.0
  %v961 = vsel %vm736, %v282, 0.0
  %v962 = vsel %vm737, %v285, 0.0
  %v963 = vsel %vm738, %v290, 0.0
  %v964 = vsel %vm739, %v293, 0.0
  %v965 = vsel %vm740, %v298, 0.0
  %v966 = vsel %vm741, %v301, 0.0
  %v967 = vsel %vm742, %v306, 0.0
  %v968 = vsel %vm743, %v309, 0.0
  %969 = vadd.xlane.f32.xlu0 %v953
  %v970 = vpop.xlane.xlu0 %969
  %971 = vadd.xlane.f32.xlu0 %v954
  %v972 = vpop.xlane.xlu0 %971
  %973 = vadd.xlane.f32.xlu0 %v955
  %v974 = vpop.xlane.xlu0 %973
  %975 = vadd.xlane.f32.xlu0 %v956
  %v976 = vpop.xlane.xlu0 %975
  %977 = vadd.xlane.f32.xlu0 %v957
  %v978 = vpop.xlane.xlu0 %977
  %979 = vadd.xlane.f32.xlu0 %v958
  %v980 = vpop.xlane.xlu0 %979
  %981 = vadd.xlane.f32.xlu0 %v959
  %v982 = vpop.xlane.xlu0 %981
  %983 = vadd.xlane.f32.xlu0 %v960
  %v984 = vpop.xlane.xlu0 %983
  %985 = vadd.xlane.f32.xlu0 %v961
  %v986 = vpop.xlane.xlu0 %985
  %987 = vadd.xlane.f32.xlu0 %v962
  %v988 = vpop.xlane.xlu0 %987
  %989 = vadd.xlane.f32.xlu0 %v963
  %v990 = vpop.xlane.xlu0 %989
  %991 = vadd.xlane.f32.xlu0 %v964
  %v992 = vpop.xlane.xlu0 %991
  %993 = vadd.xlane.f32.xlu0 %v965
  %v994 = vpop.xlane.xlu0 %993
  %995 = vadd.xlane.f32.xlu0 %v966
  %v996 = vpop.xlane.xlu0 %995
  %997 = vadd.xlane.f32.xlu0 %v967
  %v998 = vpop.xlane.xlu0 %997
  %999 = vadd.xlane.f32.xlu0 %v968
  %v1000 = vpop.xlane.xlu0 %999
  %v1001 = vadd.f32 %v937, %v970
  %v1002 = vadd.f32 %v938, %v972
  %v1003 = vadd.f32 %v939, %v974
  %v1004 = vadd.f32 %v940, %v976
  %v1005 = vadd.f32 %v941, %v978
  %v1006 = vadd.f32 %v942, %v980
  %v1007 = vadd.f32 %v943, %v982
  %v1008 = vadd.f32 %v944, %v984
  %v1009 = vadd.f32 %v945, %v986
  %v1010 = vadd.f32 %v946, %v988
  %v1011 = vadd.f32 %v947, %v990
  %v1012 = vadd.f32 %v948, %v992
  %v1013 = vadd.f32 %v949, %v994
  %v1014 = vadd.f32 %v950, %v996
  %v1015 = vadd.f32 %v951, %v998
  %v1016 = vadd.f32 %v952, %v1000
  %1017 = vst.msk [vmem:[#allocation5] sm:$0xff] %vm824, %v1001
  %1018 = vst.msk [vmem:[#allocation5 + $0x8] sm:$0xff] %vm824, %v1002
  %1019 = vst.msk [vmem:[#allocation5 + $0x10] sm:$0xff] %vm824, %v1003
  %1020 = vst.msk [vmem:[#allocation5 + $0x18] sm:$0xff] %vm824, %v1004
  %1021 = vst.msk [vmem:[#allocation5 + $0x20] sm:$0xff] %vm824, %v1005
  %1022 = vst.msk [vmem:[#allocation5 + $0x28] sm:$0xff] %vm824, %v1006
  %1023 = vst.msk [vmem:[#allocation5 + $0x30] sm:$0xff] %vm824, %v1007
  %1024 = vst.msk [vmem:[#allocation5 + $0x38] sm:$0xff] %vm824, %v1008
  %1025 = vst.msk [vmem:[#allocation5 + $0x40] sm:$0xff] %vm824, %v1009
  %1026 = vst.msk [vmem:[#allocation5 + $0x48] sm:$0xff] %vm824, %v1010
  %1027 = vst.msk [vmem:[#allocation5 + $0x50] sm:$0xff] %vm824, %v1011
  %1028 = vst.msk [vmem:[#allocation5 + $0x58] sm:$0xff] %vm824, %v1012
  %1029 = vst.msk [vmem:[#allocation5 + $0x60] sm:$0xff] %vm824, %v1013
  %1030 = vst.msk [vmem:[#allocation5 + $0x68] sm:$0xff] %vm824, %v1014
  %1031 = vst.msk [vmem:[#allocation5 + $0x70] sm:$0xff] %vm824, %v1015
  %1032 = vst.msk [vmem:[#allocation5 + $0x78] sm:$0xff] %vm824, %v1016
  %1033 = vst.msk [vmem:[#allocation2] sm:$0xff] %vm824, %v360
  %1034 = vst.msk [vmem:[#allocation2 + $0x8] sm:$0xff] %vm824, %v361
  %1035 = vst.msk [vmem:[#allocation2 + $0x10] sm:$0xff] %vm824, %v362
  %1036 = vst.msk [vmem:[#allocation2 + $0x18] sm:$0xff] %vm824, %v363
  %1037 = vst.msk [vmem:[#allocation2 + $0x20] sm:$0xff] %vm824, %v364
  %1038 = vst.msk [vmem:[#allocation2 + $0x28] sm:$0xff] %vm824, %v365
  %1039 = vst.msk [vmem:[#allocation2 + $0x30] sm:$0xff] %vm824, %v366
  %1040 = vst.msk [vmem:[#allocation2 + $0x38] sm:$0xff] %vm824, %v367
  %1041 = vst.msk [vmem:[#allocation2 + $0x40] sm:$0xff] %vm824, %v368
  %1042 = vst.msk [vmem:[#allocation2 + $0x48] sm:$0xff] %vm824, %v369
  %1043 = vst.msk [vmem:[#allocation2 + $0x50] sm:$0xff] %vm824, %v370
  %1044 = vst.msk [vmem:[#allocation2 + $0x58] sm:$0xff] %vm824, %v371
  %1045 = vst.msk [vmem:[#allocation2 + $0x60] sm:$0xff] %vm824, %v372
  %1046 = vst.msk [vmem:[#allocation2 + $0x68] sm:$0xff] %vm824, %v373
  %1047 = vst.msk [vmem:[#allocation2 + $0x70] sm:$0xff] %vm824, %v374
  %1048 = vst.msk [vmem:[#allocation2 + $0x78] sm:$0xff] %vm824, %v375
  // Predicated region
  $region22: #{tpu_custom_call.1} parent=0 // pred_check
    %p1049 = pneg %p18
  $region23: #{tpu_custom_call.1} parent=0 // pred_check_branch
    %1051 = sbr.rel (%p1049) target = $region25
  $region24: #{tpu_custom_call.1} parent=0 // pred_region
    %v1052 = vld [vmem:[#allocation4] sm:$0xff]
    %v1053 = vld [vmem:[#allocation4 + $0x8] sm:$0xff]
    %v1054 = vld [vmem:[#allocation4 + $0x10] sm:$0xff]
    %v1055 = vld [vmem:[#allocation4 + $0x18] sm:$0xff]
    %v1056 = vld [vmem:[#allocation4 + $0x20] sm:$0xff]
    %v1057 = vld [vmem:[#allocation4 + $0x28] sm:$0xff]
    %v1058 = vld [vmem:[#allocation4 + $0x30] sm:$0xff]
    %v1059 = vld [vmem:[#allocation4 + $0x38] sm:$0xff]
    %v1060 = vld [vmem:[#allocation4 + $0x40] sm:$0xff]
    %v1061 = vld [vmem:[#allocation4 + $0x48] sm:$0xff]
    %v1062 = vld [vmem:[#allocation4 + $0x50] sm:$0xff]
    %v1063 = vld [vmem:[#allocation4 + $0x58] sm:$0xff]
    %v1064 = vld [vmem:[#allocation4 + $0x60] sm:$0xff]
    %v1065 = vld [vmem:[#allocation4 + $0x68] sm:$0xff]
    %v1066 = vld [vmem:[#allocation4 + $0x70] sm:$0xff]
    %v1067 = vld [vmem:[#allocation4 + $0x78] sm:$0xff]
    %vm1068 = vcmp.lt.f32.partialorder %v1052, 1e-06
    %vm1069 = vcmp.lt.f32.partialorder %v1053, 1e-06
    %vm1070 = vcmp.lt.f32.partialorder %v1054, 1e-06
    %vm1071 = vcmp.lt.f32.partialorder %v1055, 1e-06
    %vm1072 = vcmp.lt.f32.partialorder %v1056, 1e-06
    %vm1073 = vcmp.lt.f32.partialorder %v1057, 1e-06
    %vm1074 = vcmp.lt.f32.partialorder %v1058, 1e-06
    %vm1075 = vcmp.lt.f32.partialorder %v1059, 1e-06
    %vm1076 = vcmp.lt.f32.partialorder %v1060, 1e-06
    %vm1077 = vcmp.lt.f32.partialorder %v1061, 1e-06
    %vm1078 = vcmp.lt.f32.partialorder %v1062, 1e-06
    %vm1079 = vcmp.lt.f32.partialorder %v1063, 1e-06
    %vm1080 = vcmp.lt.f32.partialorder %v1064, 1e-06
    %vm1081 = vcmp.lt.f32.partialorder %v1065, 1e-06
    %vm1082 = vcmp.lt.f32.partialorder %v1066, 1e-06
    %vm1083 = vcmp.lt.f32.partialorder %v1067, 1e-06
    %v1084 = vsel %vm1068, 1.0, %v1052
    %v1085 = vsel %vm1069, 1.0, %v1053
    %v1086 = vsel %vm1070, 1.0, %v1054
    %v1087 = vsel %vm1071, 1.0, %v1055
    %v1088 = vsel %vm1072, 1.0, %v1056
    %v1089 = vsel %vm1073, 1.0, %v1057
    %v1090 = vsel %vm1074, 1.0, %v1058
    %v1091 = vsel %vm1075, 1.0, %v1059
    %v1092 = vsel %vm1076, 1.0, %v1060
    %v1093 = vsel %vm1077, 1.0, %v1061
    %v1094 = vsel %vm1078, 1.0, %v1062
    %v1095 = vsel %vm1079, 1.0, %v1063
    %v1096 = vsel %vm1080, 1.0, %v1064
    %v1097 = vsel %vm1081, 1.0, %v1065
    %v1098 = vsel %vm1082, 1.0, %v1066
    %v1099 = vsel %vm1083, 1.0, %v1067
    %v1100 = vld [vmem:[#allocation2] sm:$0xff]
    %v1101 = vld [vmem:[#allocation2 + $0x8] sm:$0xff]
    %v1102 = vld [vmem:[#allocation2 + $0x10] sm:$0xff]
    %v1103 = vld [vmem:[#allocation2 + $0x18] sm:$0xff]
    %v1104 = vld [vmem:[#allocation2 + $0x20] sm:$0xff]
    %v1105 = vld [vmem:[#allocation2 + $0x28] sm:$0xff]
    %v1106 = vld [vmem:[#allocation2 + $0x30] sm:$0xff]
    %v1107 = vld [vmem:[#allocation2 + $0x38] sm:$0xff]
    %v1108 = vld [vmem:[#allocation2 + $0x40] sm:$0xff]
    %v1109 = vld [vmem:[#allocation2 + $0x48] sm:$0xff]
    %v1110 = vld [vmem:[#allocation2 + $0x50] sm:$0xff]
    %v1111 = vld [vmem:[#allocation2 + $0x58] sm:$0xff]
    %v1112 = vld [vmem:[#allocation2 + $0x60] sm:$0xff]
    %v1113 = vld [vmem:[#allocation2 + $0x68] sm:$0xff]
    %v1114 = vld [vmem:[#allocation2 + $0x70] sm:$0xff]
    %v1115 = vld [vmem:[#allocation2 + $0x78] sm:$0xff]
    %v1116 = vld [vmem:[#allocation3] sm:$0xff]
    %v1117 = vld [vmem:[#allocation3 + $0x8] sm:$0xff]
    %v1118 = vld [vmem:[#allocation3 + $0x10] sm:$0xff]
    %v1119 = vld [vmem:[#allocation3 + $0x18] sm:$0xff]
    %v1120 = vld [vmem:[#allocation3 + $0x20] sm:$0xff]
    %v1121 = vld [vmem:[#allocation3 + $0x28] sm:$0xff]
    %v1122 = vld [vmem:[#allocation3 + $0x30] sm:$0xff]
    %v1123 = vld [vmem:[#allocation3 + $0x38] sm:$0xff]
    %v1124 = vld [vmem:[#allocation3 + $0x40] sm:$0xff]
    %v1125 = vld [vmem:[#allocation3 + $0x48] sm:$0xff]
    %v1126 = vld [vmem:[#allocation3 + $0x50] sm:$0xff]
    %v1127 = vld [vmem:[#allocation3 + $0x58] sm:$0xff]
    %v1128 = vld [vmem:[#allocation3 + $0x60] sm:$0xff]
    %v1129 = vld [vmem:[#allocation3 + $0x68] sm:$0xff]
    %v1130 = vld [vmem:[#allocation3 + $0x70] sm:$0xff]
    %v1131 = vld [vmem:[#allocation3 + $0x78] sm:$0xff]
    %v1132 = vlog2.pop %v1116
    %v1133 = vmul.f32 %v1132, 0.6931472
    %v1134 = vlog2.pop %v1117
    %v1135 = vmul.f32 %v1134, 0.6931472
    %v1136 = vlog2.pop %v1118
    %v1137 = vmul.f32 %v1136, 0.6931472
    %v1138 = vlog2.pop %v1119
    %v1139 = vmul.f32 %v1138, 0.6931472
    %v1140 = vlog2.pop %v1120
    %v1141 = vmul.f32 %v1140, 0.6931472
    %v1142 = vlog2.pop %v1121
    %v1143 = vmul.f32 %v1142, 0.6931472
    %v1144 = vlog2.pop %v1122
    %v1145 = vmul.f32 %v1144, 0.6931472
    %v1146 = vlog2.pop %v1123
    %v1147 = vmul.f32 %v1146, 0.6931472
    %v1148 = vlog2.pop %v1124
    %v1149 = vmul.f32 %v1148, 0.6931472
    %v1150 = vlog2.pop %v1125
    %v1151 = vmul.f32 %v1150, 0.6931472
    %v1152 = vlog2.pop %v1126
    %v1153 = vmul.f32 %v1152, 0.6931472
    %v1154 = vlog2.pop %v1127
    %v1155 = vmul.f32 %v1154, 0.6931472
    %v1156 = vlog2.pop %v1128
    %v1157 = vmul.f32 %v1156, 0.6931472
    %v1158 = vlog2.pop %v1129
    %v1159 = vmul.f32 %v1158, 0.6931472
    %v1160 = vlog2.pop %v1130
    %v1161 = vmul.f32 %v1160, 0.6931472
    %v1162 = vlog2.pop %v1131
    %v1163 = vmul.f32 %v1162, 0.6931472
    %v1164 = vadd.f32 %v1100, %v1133
    %v1165 = vadd.f32 %v1101, %v1135
    %v1166 = vadd.f32 %v1102, %v1137
    %v1167 = vadd.f32 %v1103, %v1139
    %v1168 = vadd.f32 %v1104, %v1141
    %v1169 = vadd.f32 %v1105, %v1143
    %v1170 = vadd.f32 %v1106, %v1145
    %v1171 = vadd.f32 %v1107, %v1147
    %v1172 = vadd.f32 %v1108, %v1149
    %v1173 = vadd.f32 %v1109, %v1151
    %v1174 = vadd.f32 %v1110, %v1153
    %v1175 = vadd.f32 %v1111, %v1155
    %v1176 = vadd.f32 %v1112, %v1157
    %v1177 = vadd.f32 %v1113, %v1159
    %v1178 = vadd.f32 %v1114, %v1161
    %v1179 = vadd.f32 %v1115, %v1163
    %v1180 = vld [vmem:[#allocation5] sm:$0xff]
    %v1181 = vld [vmem:[#allocation5 + $0x8] sm:$0xff]
    %v1182 = vld [vmem:[#allocation5 + $0x10] sm:$0xff]
    %v1183 = vld [vmem:[#allocation5 + $0x18] sm:$0xff]
    %v1184 = vld [vmem:[#allocation5 + $0x20] sm:$0xff]
    %v1185 = vld [vmem:[#allocation5 + $0x28] sm:$0xff]
    %v1186 = vld [vmem:[#allocation5 + $0x30] sm:$0xff]
    %v1187 = vld [vmem:[#allocation5 + $0x38] sm:$0xff]
    %v1188 = vld [vmem:[#allocation5 + $0x40] sm:$0xff]
    %v1189 = vld [vmem:[#allocation5 + $0x48] sm:$0xff]
    %v1190 = vld [vmem:[#allocation5 + $0x50] sm:$0xff]
    %v1191 = vld [vmem:[#allocation5 + $0x58] sm:$0xff]
    %v1192 = vld [vmem:[#allocation5 + $0x60] sm:$0xff]
    %v1193 = vld [vmem:[#allocation5 + $0x68] sm:$0xff]
    %v1194 = vld [vmem:[#allocation5 + $0x70] sm:$0xff]
    %v1195 = vld [vmem:[#allocation5 + $0x78] sm:$0xff]
    %v1196 = vmul.f32 %v1052, %v1164
    %v1197 = vmul.f32 %v1053, %v1165
    %v1198 = vmul.f32 %v1054, %v1166
    %v1199 = vmul.f32 %v1055, %v1167
    %v1200 = vmul.f32 %v1056, %v1168
    %v1201 = vmul.f32 %v1057, %v1169
    %v1202 = vmul.f32 %v1058, %v1170
    %v1203 = vmul.f32 %v1059, %v1171
    %v1204 = vmul.f32 %v1060, %v1172
    %v1205 = vmul.f32 %v1061, %v1173
    %v1206 = vmul.f32 %v1062, %v1174
    %v1207 = vmul.f32 %v1063, %v1175
    %v1208 = vmul.f32 %v1064, %v1176
    %v1209 = vmul.f32 %v1065, %v1177
    %v1210 = vmul.f32 %v1066, %v1178
    %v1211 = vmul.f32 %v1067, %v1179
    %v1212 = vsub.f32 %v1180, %v1196
    %v1213 = vsub.f32 %v1181, %v1197
    %v1214 = vsub.f32 %v1182, %v1198
    %v1215 = vsub.f32 %v1183, %v1199
    %v1216 = vsub.f32 %v1184, %v1200
    %v1217 = vsub.f32 %v1185, %v1201
    %v1218 = vsub.f32 %v1186, %v1202
    %v1219 = vsub.f32 %v1187, %v1203
    %v1220 = vsub.f32 %v1188, %v1204
    %v1221 = vsub.f32 %v1189, %v1205
    %v1222 = vsub.f32 %v1190, %v1206
    %v1223 = vsub.f32 %v1191, %v1207
    %v1224 = vsub.f32 %v1192, %v1208
    %v1225 = vsub.f32 %v1193, %v1209
    %v1226 = vsub.f32 %v1194, %v1210
    %v1227 = vsub.f32 %v1195, %v1211
    %v1228 = vrcp.pop %v1084
    %v1229 = vrcp.pop %v1085
    %v1230 = vrcp.pop %v1086
    %v1231 = vrcp.pop %v1087
    %v1232 = vrcp.pop %v1088
    %v1233 = vrcp.pop %v1089
    %v1234 = vrcp.pop %v1090
    %v1235 = vrcp.pop %v1091
    %v1236 = vrcp.pop %v1092
    %v1237 = vrcp.pop %v1093
    %v1238 = vrcp.pop %v1094
    %v1239 = vrcp.pop %v1095
    %v1240 = vrcp.pop %v1096
    %v1241 = vrcp.pop %v1097
    %v1242 = vrcp.pop %v1098
    %v1243 = vrcp.pop %v1099
    %v1244 = vmul.f32 %v1212, %v1228
    %v1245 = vmul.f32 %v1213, %v1229
    %v1246 = vmul.f32 %v1214, %v1230
    %v1247 = vmul.f32 %v1215, %v1231
    %v1248 = vmul.f32 %v1216, %v1232
    %v1249 = vmul.f32 %v1217, %v1233
    %v1250 = vmul.f32 %v1218, %v1234
    %v1251 = vmul.f32 %v1219, %v1235
    %v1252 = vmul.f32 %v1220, %v1236
    %v1253 = vmul.f32 %v1221, %v1237
    %v1254 = vmul.f32 %v1222, %v1238
    %v1255 = vmul.f32 %v1223, %v1239
    %v1256 = vmul.f32 %v1224, %v1240
    %v1257 = vmul.f32 %v1225, %v1241
    %v1258 = vmul.f32 %v1226, %v1242
    %v1259 = vmul.f32 %v1227, %v1243
    %v1260 = vmul.f32 %v1244, -1.0
    %v1261 = vmul.f32 %v1245, -1.0
    %v1262 = vmul.f32 %v1246, -1.0
    %v1263 = vmul.f32 %v1247, -1.0
    %v1264 = vmul.f32 %v1248, -1.0
    %v1265 = vmul.f32 %v1249, -1.0
    %v1266 = vmul.f32 %v1250, -1.0
    %v1267 = vmul.f32 %v1251, -1.0
    %v1268 = vmul.f32 %v1252, -1.0
    %v1269 = vmul.f32 %v1253, -1.0
    %v1270 = vmul.f32 %v1254, -1.0
    %v1271 = vmul.f32 %v1255, -1.0
    %v1272 = vmul.f32 %v1256, -1.0
    %v1273 = vmul.f32 %v1257, -1.0
    %v1274 = vmul.f32 %v1258, -1.0
    %v1275 = vmul.f32 %v1259, -1.0
    %1276 = vst.msk [vmem:[%s4] sm:$0xff] %vm824, %v1260
    %1277 = vst.msk [vmem:[%s4 + $0x8] sm:$0xff] %vm824, %v1261
    %1278 = vst.msk [vmem:[%s4 + $0x10] sm:$0xff] %vm824, %v1262
    %1279 = vst.msk [vmem:[%s4 + $0x18] sm:$0xff] %vm824, %v1263
    %1280 = vst.msk [vmem:[%s4 + $0x20] sm:$0xff] %vm824, %v1264
    %1281 = vst.msk [vmem:[%s4 + $0x28] sm:$0xff] %vm824, %v1265
    %1282 = vst.msk [vmem:[%s4 + $0x30] sm:$0xff] %vm824, %v1266
    %1283 = vst.msk [vmem:[%s4 + $0x38] sm:$0xff] %vm824, %v1267
    %1284 = vst.msk [vmem:[%s4 + $0x40] sm:$0xff] %vm824, %v1268
    %1285 = vst.msk [vmem:[%s4 + $0x48] sm:$0xff] %vm824, %v1269
    %1286 = vst.msk [vmem:[%s4 + $0x50] sm:$0xff] %vm824, %v1270
    %1287 = vst.msk [vmem:[%s4 + $0x58] sm:$0xff] %vm824, %v1271
    %1288 = vst.msk [vmem:[%s4 + $0x60] sm:$0xff] %vm824, %v1272
    %1289 = vst.msk [vmem:[%s4 + $0x68] sm:$0xff] %vm824, %v1273
    %1290 = vst.msk [vmem:[%s4 + $0x70] sm:$0xff] %vm824, %v1274
    %1291 = vst.msk [vmem:[%s4 + $0x78] sm:$0xff] %vm824, %v1275
  $region25: #{tpu_custom_call.1} parent=0 // pred_fallthru
    _
  // Predicated region
  $region26: #{tpu_custom_call.1} parent=0 // pred_check
    _
  $region27: #{tpu_custom_call.1} parent=0 // pred_check_branch
    %1293 = sbr.rel (0) target = $region29
  $region28: #{tpu_custom_call.1} parent=0 // pred_region
    _
  $region29: #{tpu_custom_call.1} parent=0 // pred_fallthru
    _
  // Predicated region
  $region30: #{tpu_custom_call.1} parent=0 // pred_check
    _
  $region31: #{tpu_custom_call.1} parent=0 // pred_check_branch
    %1295 = sbr.rel (0) target = $region33
  $region32: #{tpu_custom_call.1} parent=0 // pred_region
    _
  $region33: #{tpu_custom_call.1} parent=0 // pred_fallthru
    _

</llo_original>
